<compile_context>
chip_gen: v7x
topology: tpu7x:2x2x1
jax: 0.10.0
libtpu: 0.0.40
codegen_flags: <defaults>
</compile_context>

<pallas_src>
import jax
import jax.numpy as jnp
from jax.experimental import pallas as pl
from jax.experimental.pallas import tpu as pltpu


def tdgnn_graphsage_kernel(a1_ref, s1_ref, x_ref, w1t_ref,
                           a2_ref, s2_ref, w2t_ref, wct_ref,
                           out_ref, m1_acc_ref, m2_acc_ref):
    f32 = jnp.float32
    bf16 = jnp.bfloat16
    i = pl.program_id(0)           # node-row tile (M1 rows / M2 contraction)
    k = pl.program_id(1)           # layer-1 contraction tile (A1 cols / X rows)
    ni = pl.num_programs(0)
    nk = pl.num_programs(1)

    @pl.when(jnp.logical_and(i == 0, k == 0))
    def _init_m2():
        m2_acc_ref[...] = jnp.zeros_like(m2_acc_ref)

    @pl.when(k == 0)
    def _init_m1():
        m1_acc_ref[...] = jnp.zeros_like(m1_acc_ref)

    # ---- Layer-1 aggregation, K-tiled: M1[i] += A[i, k] @ X[k] ----
    # int8 0/1 adjacency -> bf16 (exact) on the VPU, bf16 MXU, f32 accumulate.
    m1_acc_ref[...] += jnp.dot(a1_ref[...].astype(bf16), x_ref[...],
                               preferred_element_type=f32)              # (TN, F)

    # ---- Last K step: finish layer 1 for this node tile, update M2 ----
    @pl.when(k == nk - 1)
    def _layer1_and_layer2_agg():
        m1 = m1_acc_ref[...] * s1_ref[...]          # exact f32 1/deg row scale
        z1 = jnp.maximum(
            jnp.dot(m1.astype(bf16), w1t_ref[...], preferred_element_type=f32),
            0.0)                                                         # (TN, E)
        # M2 += A2[:, tile] @ Z1_tile   (0/1 adjacency columns for this tile)
        m2_acc_ref[...] += jnp.dot(a2_ref[...].astype(bf16), z1.astype(bf16),
                                   preferred_element_type=f32)           # (2B, E)

    # ---- Final grid step: Encoder 2, mean pooling, classifier ----
    @pl.when(jnp.logical_and(i == ni - 1, k == nk - 1))
    def _finalize():
        m2 = m2_acc_ref[...] * s2_ref[...]          # exact f32 1/deg row scale
        z2 = jnp.maximum(
            jnp.dot(m2.astype(bf16), w2t_ref[...], preferred_element_type=f32),
            0.0)                                                         # (2B, E)
        b = out_ref.shape[0]
        # pool_embeds('mean'): rows [0:B] are edge sources, [B:2B] destinations.
        pooled = (z2[:b, :] + z2[b:, :]) * 0.5                           # (B, E)
        # Classifier (weight.mm(embeds).t()), lane-dense padded output (B, 128).
        out_ref[...] = jnp.dot(pooled.astype(bf16), wct_ref[...],
                               preferred_element_type=f32)


def tdgnn_graphsage_forward(adj, endpoints, x, w1, w2, wc, *,
                            node_tile=256, k_tile=256):
    """adj: (N,N) 0/1 temporal adjacency with self-loops (gcn=True),
    endpoints: (2B,) node ids ordered [src_0..src_{B-1}, dst_0..dst_{B-1}],
    x: (N,F) raw node features, w1: (E,F), w2: (E,E), wc: (C,E)
    (PyTorch W.mm(x) convention). Returns (B, C) logits."""
    N, F = x.shape
    E = w1.shape[0]
    twoB = int(endpoints.shape[0])
    B = twoB // 2
    C = wc.shape[0]
    assert twoB == 2 * B
    assert N % node_tile == 0 and N % k_tile == 0, \
        "pad the sampled node set to a multiple of the tile sizes"

    LANE = 128
    Cp = LANE                                     # lane-dense classifier output
    f32, bf16 = jnp.float32, jnp.bfloat16

    # Wrapper-side layout prep: exact int8 0/1 adjacency + f32 row scales,
    # pre-transposed bf16 weights (no in-kernel transposes), bf16 features.
    adj_f = adj.astype(f32)
    deg = jnp.sum(adj_f, axis=1, keepdims=True)
    scale1 = (1.0 / deg).astype(f32)              # (N, 1)
    a1_i8 = adj_f.astype(jnp.int8)                # (N, N)   exact 0/1
    a2_i8 = a1_i8[endpoints, :]                   # (2B, N)  exact 0/1
    scale2 = scale1[endpoints, :]                 # (2B, 1)

    x_b = x.astype(bf16)                          # (N, F)
    w1t = w1.T.astype(bf16)                       # (F, E)
    w2t = w2.T.astype(bf16)                       # (E, E)
    wct = jnp.zeros((E, Cp), f32).at[:, :C].set(wc.T).astype(bf16)   # (E, 128)

    ni = N // node_tile
    nk = N // k_tile

    out_padded = pl.pallas_call(
        tdgnn_graphsage_kernel,
        out_shape=jax.ShapeDtypeStruct((B, Cp), f32),
        grid_spec=pltpu.PrefetchScalarGridSpec(
            num_scalar_prefetch=0,
            grid=(ni, nk),                                  # (node tiles, K tiles)
            in_specs=[
                pl.BlockSpec((node_tile, k_tile), lambda i, k: (i, k)),  # A1 int8 block
                pl.BlockSpec((node_tile, 1),      lambda i, k: (i, 0)),  # 1/deg rows
                pl.BlockSpec((k_tile, F),         lambda i, k: (k, 0)),  # X block
                pl.BlockSpec((F, E),              lambda i, k: (0, 0)),  # W1^T resident
                pl.BlockSpec((twoB, node_tile),   lambda i, k: (0, i)),  # A2 col tile
                pl.BlockSpec((twoB, 1),           lambda i, k: (0, 0)),  # 1/deg (edges)
                pl.BlockSpec((E, E),              lambda i, k: (0, 0)),  # W2^T resident
                pl.BlockSpec((E, Cp),             lambda i, k: (0, 0)),  # Wc^T resident
            ],
            out_specs=pl.BlockSpec((B, Cp), lambda i, k: (0, 0)),
            scratch_shapes=[
                pltpu.VMEM((node_tile, F), f32),            # M1 accumulator (per i)
                pltpu.VMEM((twoB, E), f32),                 # M2 accumulator (whole grid)
            ],
        ),
        compiler_params=pltpu.CompilerParams(
            dimension_semantics=("arbitrary", "arbitrary"),  # both axes are reductions
            vmem_limit_bytes=48 * 1024 * 1024,
        ),
    )(a1_i8, scale1, x_b, w1t, a2_i8, scale2, w2t, wct)

    return out_padded[:, :C]


def xavier_uniform(key, shape):
    fan_out, fan_in = shape
    limit = (6.0 / (fan_in + fan_out)) ** 0.5
    return jax.random.uniform(key, shape, jnp.float32, -limit, limit)


def reference_forward(adj, endpoints, x, w1, w2, wc):
    adj = adj.astype(jnp.float32)
    a1 = adj / jnp.sum(adj, axis=1, keepdims=True)
    a2 = a1[endpoints, :]
    m1 = a1 @ x
    z1 = jnp.maximum(m1 @ w1.T, 0.0)
    m2 = a2 @ z1
    z2 = jnp.maximum(m2 @ w2.T, 0.0)
    B = endpoints.shape[0] // 2
    pooled = (z2[:B, :] + z2[B:, :]) * 0.5
    return pooled @ wc.T


if __name__ == "__main__":
    # Small, module-consistent shapes.
    N = 512    # sampled temporal-neighbourhood node-set size
    F = 32     # raw feature dim (feat_data.shape[1])
    E = 128    # embed_dim
    C = 2      # num_classes
    B = 128    # batched edge queries per pallas_call (2B = 256 endpoint rows)

    key = jax.random.PRNGKey(0)
    k_feat, k_adj, k_w1, k_w2, k_wc = jax.random.split(key, 5)

    # frozen nn.Embedding weight = randn -> raw node features
    x = jax.random.normal(k_feat, (N, F), jnp.float32)

    # Deterministic synthetic temporal-neighbourhood structure: 0/1 adjacency
    # with self-loops (gcn=True); the MeanAggregator mean mask is adj/deg.
    adj = (jax.random.uniform(k_adj, (N, N)) < 0.05).astype(jnp.float32)
    adj = jnp.maximum(adj, jnp.eye(N, dtype=jnp.float32))

    # B edges; endpoint node ids ordered [sources..., destinations...].
    src = jnp.arange(0, B)
    dst = jnp.arange(B, 2 * B)
    endpoints = jnp.concatenate([src, dst], axis=0)                   # (2B,)

    # Encoder weights (embed_dim x in_dim) and classifier (num_classes x embed_dim),
    # Xavier-uniform as in init_graphsage_params / Encoder.__init__.
    w1 = xavier_uniform(k_w1, (E, F))
    w2 = xavier_uniform(k_w2, (E, E))
    wc = xavier_uniform(k_wc, (C, E))

    out = tdgnn_graphsage_forward(adj, endpoints, x, w1, w2, wc,
                                  node_tile=256, k_tile=256)
    out = jax.block_until_ready(out)

    ref = reference_forward(adj, endpoints, x, w1, w2, wc)
    assert out.shape == (B, C), out.shape
    # bf16 MXU inputs with f32 accumulation (and exact int8 adjacency + f32
    # row scales) vs. pure-f32 reference.
    assert jnp.allclose(out, ref, atol=2e-2, rtol=2e-2), (out, ref)

    # TODO(synk): temporal ngh_finder sampling / per-edge timestamp masking is
    # host-side Python in the original module; here it is represented by the
    # precomputed 0/1 adjacency + degree scales. For very large graphs replace
    # the dense A@X with a PrefetchScalarGridSpec neighbor-index gather
    # matching the real sampled GraphSAGE aggregation.
    print("KERNEL_OK")
</pallas_src>

<mosaic_0001>
module attributes {stable_mosaic.version = 11 : i64} {
  func.func @tdgnn_graphsage_kernel(%arg0: i32, %arg1: i32, %arg2: memref<256x256xi8, #tpu.memory_space<vmem>>, %arg3: memref<256x1xf32, #tpu.memory_space<vmem>>, %arg4: memref<256x32xbf16, #tpu.memory_space<vmem>>, %arg5: memref<32x128xbf16, #tpu.memory_space<vmem>>, %arg6: memref<256x256xi8, #tpu.memory_space<vmem>>, %arg7: memref<256x1xf32, #tpu.memory_space<vmem>>, %arg8: memref<128x128xbf16, #tpu.memory_space<vmem>>, %arg9: memref<128x128xbf16, #tpu.memory_space<vmem>>, %arg10: memref<128x128xf32, #tpu.memory_space<vmem>>, %arg11: memref<256x32xf32, #tpu.memory_space<vmem>>, %arg12: memref<256x128xf32, #tpu.memory_space<vmem>>) attributes {dimension_semantics = [#tpu.dimension_semantics<arbitrary>, #tpu.dimension_semantics<arbitrary>], iteration_bounds = array<i64: 2, 2>, scalar_prefetch = 0 : i64, scratch_operands = 2 : i64, tpu.core_type = #tpu.core_type<tc>, window_params = [{transform_indices = @transform_0, window_bounds = array<i64: 256, 256>}, {transform_indices = @transform_1, window_bounds = array<i64: 256, 1>}, {transform_indices = @transform_2, window_bounds = array<i64: 256, 32>}, {pipeline_mode = #tpu.pipeline_mode<synchronous>, transform_indices = @transform_3, window_bounds = array<i64: 32, 128>}, {transform_indices = @transform_4, window_bounds = array<i64: 256, 256>}, {pipeline_mode = #tpu.pipeline_mode<synchronous>, transform_indices = @transform_5, window_bounds = array<i64: 256, 1>}, {pipeline_mode = #tpu.pipeline_mode<synchronous>, transform_indices = @transform_6, window_bounds = array<i64: 128, 128>}, {pipeline_mode = #tpu.pipeline_mode<synchronous>, transform_indices = @transform_7, window_bounds = array<i64: 128, 128>}, {pipeline_mode = #tpu.pipeline_mode<synchronous>, transform_indices = @transform_8, window_bounds = array<i64: 128, 128>}]} {
    %c0_i32 = arith.constant 0 : i32
    %0 = arith.cmpi eq, %arg0, %c0_i32 : i32
    %c0_i32_0 = arith.constant 0 : i32
    %1 = arith.cmpi eq, %arg1, %c0_i32_0 : i32
    %2 = arith.andi %0, %1 : i1
    %3 = arith.extui %2 : i1 to i32
    %c0_i32_1 = arith.constant 0 : i32
    %4 = arith.cmpi ne, %3, %c0_i32_1 : i32
    scf.if %4 {
      %cst_15 = arith.constant 0.000000e+00 : f32
      %23 = vector.broadcast %cst_15 : f32 to vector<256x128xf32>
      %c0_16 = arith.constant 0 : index
      %c0_17 = arith.constant 0 : index
      %24 = vector.load %arg12[%c0_16, %c0_17] : memref<256x128xf32, #tpu.memory_space<vmem>>, vector<256x128xf32>
      tpu.vector_store %arg12[%c0_16, %c0_17], %23 {strides = array<i32>} : memref<256x128xf32, #tpu.memory_space<vmem>>, vector<256x128xf32>,
    } else {
    }
    %c0_i32_2 = arith.constant 0 : i32
    %5 = arith.cmpi eq, %arg1, %c0_i32_2 : i32
    %6 = arith.extui %5 : i1 to i32
    %c0_i32_3 = arith.constant 0 : i32
    %7 = arith.cmpi ne, %6, %c0_i32_3 : i32
    scf.if %7 {
      %cst_15 = arith.constant 0.000000e+00 : f32
      %23 = vector.broadcast %cst_15 : f32 to vector<256x32xf32>
      %c0_16 = arith.constant 0 : index
      %c0_17 = arith.constant 0 : index
      %24 = vector.load %arg11[%c0_16, %c0_17] : memref<256x32xf32, #tpu.memory_space<vmem>>, vector<256x32xf32>
      tpu.vector_store %arg11[%c0_16, %c0_17], %23 {strides = array<i32>} : memref<256x32xf32, #tpu.memory_space<vmem>>, vector<256x32xf32>,
    } else {
    }
    %c0 = arith.constant 0 : index
    %c0_4 = arith.constant 0 : index
    %8 = vector.load %arg11[%c0, %c0_4] : memref<256x32xf32, #tpu.memory_space<vmem>>, vector<256x32xf32>
    %c0_5 = arith.constant 0 : index
    %c0_6 = arith.constant 0 : index
    %9 = vector.load %arg2[%c0_5, %c0_6] : memref<256x256xi8, #tpu.memory_space<vmem>>, vector<256x256xi8>
    %10 = arith.sitofp %9 : vector<256x256xi8> to vector<256x256xbf16>
    %c0_7 = arith.constant 0 : index
    %c0_8 = arith.constant 0 : index
    %11 = vector.load %arg4[%c0_7, %c0_8] : memref<256x32xbf16, #tpu.memory_space<vmem>>, vector<256x32xbf16>
    %cst = arith.constant dense<0.000000e+00> : vector<256x32xf32>
    %12 = tpu.matmul %10, %11, %cst {dimension_numbers = #tpu.dot_dimension_numbers<[1], [0], [0], [1], [0, 0, 1, 1], [], []>} : vector<256x256xbf16>, vector<256x32xbf16>, vector<256x32xf32> -> vector<256x32xf32>
    %13 = arith.addf %8, %12 : vector<256x32xf32>
    %c0_9 = arith.constant 0 : index
    %c0_10 = arith.constant 0 : index
    %14 = vector.load %arg11[%c0_9, %c0_10] : memref<256x32xf32, #tpu.memory_space<vmem>>, vector<256x32xf32>
    tpu.vector_store %arg11[%c0_9, %c0_10], %13 {strides = array<i32>} : memref<256x32xf32, #tpu.memory_space<vmem>>, vector<256x32xf32>,
    %c1_i32 = arith.constant 1 : i32
    %15 = arith.cmpi eq, %arg1, %c1_i32 : i32
    %16 = arith.extui %15 : i1 to i32
    %c0_i32_11 = arith.constant 0 : i32
    %17 = arith.cmpi ne, %16, %c0_i32_11 : i32
    scf.if %17 {
      %c0_15 = arith.constant 0 : index
      %c0_16 = arith.constant 0 : index
      %23 = vector.load %arg11[%c0_15, %c0_16] : memref<256x32xf32, #tpu.memory_space<vmem>>, vector<256x32xf32>
      %c0_17 = arith.constant 0 : index
      %c0_18 = arith.constant 0 : index
      %24 = vector.load %arg3[%c0_17, %c0_18] : memref<256x1xf32, #tpu.memory_space<vmem>>, vector<256x1xf32>
      %25 = vector.broadcast %24 : vector<256x1xf32> to vector<256x32xf32>
      %26 = arith.mulf %23, %25 : vector<256x32xf32>
      %27 = arith.truncf %26 : vector<256x32xf32> to vector<256x32xbf16>
      %c0_19 = arith.constant 0 : index
      %c0_20 = arith.constant 0 : index
      %28 = vector.load %arg5[%c0_19, %c0_20] : memref<32x128xbf16, #tpu.memory_space<vmem>>, vector<32x128xbf16>
      %cst_21 = arith.constant dense<0.000000e+00> : vector<256x128xf32>
      %29 = tpu.matmul %27, %28, %cst_21 {dimension_numbers = #tpu.dot_dimension_numbers<[1], [0], [0], [1], [0, 0, 1, 1], [], []>} : vector<256x32xbf16>, vector<32x128xbf16>, vector<256x128xf32> -> vector<256x128xf32>
      %cst_22 = arith.constant 0.000000e+00 : f32
      %30 = vector.broadcast %cst_22 : f32 to vector<256x128xf32>
      %31 = arith.maximumf %29, %30 : vector<256x128xf32>
      %c0_23 = arith.constant 0 : index
      %c0_24 = arith.constant 0 : index
      %32 = vector.load %arg12[%c0_23, %c0_24] : memref<256x128xf32, #tpu.memory_space<vmem>>, vector<256x128xf32>
      %c0_25 = arith.constant 0 : index
      %c0_26 = arith.constant 0 : index
      %33 = vector.load %arg6[%c0_25, %c0_26] : memref<256x256xi8, #tpu.memory_space<vmem>>, vector<256x256xi8>
      %34 = arith.sitofp %33 : vector<256x256xi8> to vector<256x256xbf16>
      %35 = arith.truncf %31 : vector<256x128xf32> to vector<256x128xbf16>
      %cst_27 = arith.constant dense<0.000000e+00> : vector<256x128xf32>
      %36 = tpu.matmul %34, %35, %cst_27 {dimension_numbers = #tpu.dot_dimension_numbers<[1], [0], [0], [1], [0, 0, 1, 1], [], []>} : vector<256x256xbf16>, vector<256x128xbf16>, vector<256x128xf32> -> vector<256x128xf32>
      %37 = arith.addf %32, %36 : vector<256x128xf32>
      %c0_28 = arith.constant 0 : index
      %c0_29 = arith.constant 0 : index
      %38 = vector.load %arg12[%c0_28, %c0_29] : memref<256x128xf32, #tpu.memory_space<vmem>>, vector<256x128xf32>
      tpu.vector_store %arg12[%c0_28, %c0_29], %37 {strides = array<i32>} : memref<256x128xf32, #tpu.memory_space<vmem>>, vector<256x128xf32>,
    } else {
    }
    %c1_i32_12 = arith.constant 1 : i32
    %18 = arith.cmpi eq, %arg0, %c1_i32_12 : i32
    %c1_i32_13 = arith.constant 1 : i32
    %19 = arith.cmpi eq, %arg1, %c1_i32_13 : i32
    %20 = arith.andi %18, %19 : i1
    %21 = arith.extui %20 : i1 to i32
    %c0_i32_14 = arith.constant 0 : i32
    %22 = arith.cmpi ne, %21, %c0_i32_14 : i32
    scf.if %22 {
      %c0_15 = arith.constant 0 : index
      %c0_16 = arith.constant 0 : index
      %23 = vector.load %arg12[%c0_15, %c0_16] : memref<256x128xf32, #tpu.memory_space<vmem>>, vector<256x128xf32>
      %c0_17 = arith.constant 0 : index
      %c0_18 = arith.constant 0 : index
      %24 = vector.load %arg7[%c0_17, %c0_18] : memref<256x1xf32, #tpu.memory_space<vmem>>, vector<256x1xf32>
      %25 = vector.broadcast %24 : vector<256x1xf32> to vector<256x128xf32>
      %26 = arith.mulf %23, %25 : vector<256x128xf32>
      %27 = arith.truncf %26 : vector<256x128xf32> to vector<256x128xbf16>
      %c0_19 = arith.constant 0 : index
      %c0_20 = arith.constant 0 : index
      %28 = vector.load %arg8[%c0_19, %c0_20] : memref<128x128xbf16, #tpu.memory_space<vmem>>, vector<128x128xbf16>
      %cst_21 = arith.constant dense<0.000000e+00> : vector<256x128xf32>
      %29 = tpu.matmul %27, %28, %cst_21 {dimension_numbers = #tpu.dot_dimension_numbers<[1], [0], [0], [1], [0, 0, 1, 1], [], []>} : vector<256x128xbf16>, vector<128x128xbf16>, vector<256x128xf32> -> vector<256x128xf32>
      %cst_22 = arith.constant 0.000000e+00 : f32
      %30 = vector.broadcast %cst_22 : f32 to vector<256x128xf32>
      %31 = arith.maximumf %29, %30 : vector<256x128xf32>
      %32 = vector.extract_strided_slice %31 {offsets = [0, 0], sizes = [128, 128], strides = [1, 1]} : vector<256x128xf32> to vector<128x128xf32>
      %33 = vector.extract_strided_slice %31 {offsets = [128, 0], sizes = [128, 128], strides = [1, 1]} : vector<256x128xf32> to vector<128x128xf32>
      %34 = arith.addf %32, %33 : vector<128x128xf32>
      %cst_23 = arith.constant 5.000000e-01 : f32
      %35 = vector.broadcast %cst_23 : f32 to vector<128x128xf32>
      %36 = arith.mulf %34, %35 : vector<128x128xf32>
      %37 = arith.truncf %36 : vector<128x128xf32> to vector<128x128xbf16>
      %c0_24 = arith.constant 0 : index
      %c0_25 = arith.constant 0 : index
      %38 = vector.load %arg9[%c0_24, %c0_25] : memref<128x128xbf16, #tpu.memory_space<vmem>>, vector<128x128xbf16>
      %cst_26 = arith.constant dense<0.000000e+00> : vector<128x128xf32>
      %39 = tpu.matmul %37, %38, %cst_26 {dimension_numbers = #tpu.dot_dimension_numbers<[1], [0], [0], [1], [0, 0, 1, 1], [], []>} : vector<128x128xbf16>, vector<128x128xbf16>, vector<128x128xf32> -> vector<128x128xf32>
      %c0_27 = arith.constant 0 : index
      %c0_28 = arith.constant 0 : index
      %40 = vector.load %arg10[%c0_27, %c0_28] : memref<128x128xf32, #tpu.memory_space<vmem>>, vector<128x128xf32>
      tpu.vector_store %arg10[%c0_27, %c0_28], %39 {strides = array<i32>} : memref<128x128xf32, #tpu.memory_space<vmem>>, vector<128x128xf32>,
    } else {
    }
    return
  }
  func.func @transform_0(%arg0: i32, %arg1: i32) -> (i32, i32) {
    %c0_i32 = arith.constant 0 : i32
    return %arg0, %arg1 : i32, i32
  }
  func.func @transform_1(%arg0: i32, %arg1: i32) -> (i32, i32) {
    %c0_i32 = arith.constant 0 : i32
    %c0_i32_0 = arith.constant 0 : i32
    return %arg0, %c0_i32 : i32, i32
  }
  func.func @transform_2(%arg0: i32, %arg1: i32) -> (i32, i32) {
    %c0_i32 = arith.constant 0 : i32
    %c0_i32_0 = arith.constant 0 : i32
    return %arg1, %c0_i32 : i32, i32
  }
  func.func @transform_3(%arg0: i32, %arg1: i32) -> (i32, i32) {
    %c0_i32 = arith.constant 0 : i32
    %c0_i32_0 = arith.constant 0 : i32
    %c0_i32_1 = arith.constant 0 : i32
    return %c0_i32, %c0_i32_0 : i32, i32
  }
  func.func @transform_4(%arg0: i32, %arg1: i32) -> (i32, i32) {
    %c0_i32 = arith.constant 0 : i32
    %c0_i32_0 = arith.constant 0 : i32
    return %c0_i32, %arg0 : i32, i32
  }
  func.func @transform_5(%arg0: i32, %arg1: i32) -> (i32, i32) {
    %c0_i32 = arith.constant 0 : i32
    %c0_i32_0 = arith.constant 0 : i32
    %c0_i32_1 = arith.constant 0 : i32
    return %c0_i32, %c0_i32_0 : i32, i32
  }
  func.func @transform_6(%arg0: i32, %arg1: i32) -> (i32, i32) {
    %c0_i32 = arith.constant 0 : i32
    %c0_i32_0 = arith.constant 0 : i32
    %c0_i32_1 = arith.constant 0 : i32
    return %c0_i32, %c0_i32_0 : i32, i32
  }
  func.func @transform_7(%arg0: i32, %arg1: i32) -> (i32, i32) {
    %c0_i32 = arith.constant 0 : i32
    %c0_i32_0 = arith.constant 0 : i32
    %c0_i32_1 = arith.constant 0 : i32
    return %c0_i32, %c0_i32_0 : i32, i32
  }
  func.func @transform_8(%arg0: i32, %arg1: i32) -> (i32, i32) {
    %c0_i32 = arith.constant 0 : i32
    %c0_i32_0 = arith.constant 0 : i32
    %c0_i32_1 = arith.constant 0 : i32
    return %c0_i32, %c0_i32_0 : i32, i32
  }
}

</mosaic_0001>

<llo_original>
// kernel: tpu_custom_call.1
$region0: #{tpu_custom_call.1}
  #allocation0 [shape = 'u32[]', space=smem, size = 0x4, offset = 0x4, fixed_abs, tag = 'smem constant byte address 0x4 - core index']
  #allocation1 [shape = 'u32[144,128]{1,0:T(1,128)}', space=vmem, size = 0x12000, scoped, tag = 'internal scratch']
  #allocation2 [shape = 'f32[256,32]{1,0:T(8,128)}', space=vmem, size = 0x20000, scoped, tag = 'scratch operand']
  #allocation3 [shape = 'f32[256,128]{1,0:T(8,128)}', space=vmem, size = 0x20000, scoped, tag = 'scratch operand']
  %s0 = inlined_call_operand.vmem [shape: s8[512,512], index: 0, kind: input, shape index: {}]
  %s1 = inlined_call_operand.vmem [shape: f32[512,1], index: 1, kind: input, shape index: {}]
  %s2 = inlined_call_operand.vmem [shape: bf16[512,32], index: 2, kind: input, shape index: {}]
  %s3 = inlined_call_operand.vmem [shape: bf16[32,128], index: 3, kind: input, shape index: {}]
  %s4 = inlined_call_operand.vmem [shape: s8[256,512], index: 4, kind: input, shape index: {}]
  %s5 = inlined_call_operand.vmem [shape: f32[256,1], index: 5, kind: input, shape index: {}]
  %s6 = inlined_call_operand.vmem [shape: bf16[128,128], index: 6, kind: input, shape index: {}]
  %s7 = inlined_call_operand.vmem [shape: bf16[128,128], index: 7, kind: input, shape index: {}]
  %s8 = inlined_call_operand.hbm [shape: f32[128,128], index: 8, kind: output, shape index: {}]
  %s9 = sld [smem:[#allocation0]]
  $region127: #{tpu_custom_call.1} parent=0
    _
  %s11 = ssub.s32 1, %s9
  %s12 = scalar_select 0, %s11, %s9
  $region1: #{tpu_custom_call.1} parent=0
    #allocation4 [shape = 'u8[131072]{0}', space=vmem, size = 0x20000, scoped, tag = 'input window, operand 0']
    #allocation5 [shape = 'u8[131072]{0}', space=vmem, size = 0x20000, scoped, tag = 'input window, operand 4']
    #allocation6 [shape = 'u8[65536]{0}', space=vmem, size = 0x10000, scoped, tag = 'output window, operand 0, single buffered']
    #allocation7 [shape = 's32[2]{0}', space=sflag, size = 0x8, scoped, tag = 'scoped memory for tpu_custom_call.1']
    %13 = vsyncpa [#allocation7], 0
    loop: start=0, step=1, limit=6
    $region2: #{tpu_custom_call.1} parent=1 // loop_pre_header
      _
    $region3: #{tpu_custom_call.1} parent=1 // loop_header
      %s15 = sphi 0, %s19
      %p16 = scmp.ge.s32.totalorder %s15, 6
      %s22 = sphi 0, %s34
      %s23 = sphi 0, %s30
      %s24 = sphi 0, %s22
      %s25 = sphi 0, %s23
      %s26 = sphi 0, %s24
      %s27 = sphi 0, %s25
      %s39 = sphi 0, %s41
      %s42 = sphi 0, %s39
      %s43 = sphi 0, %s42
      %s59 = sphi 0, %s43
      %s65 = sphi 0, %s67
      %s68 = sphi 0, %s65
      %s69 = sphi 0, %s68
      %s85 = sphi 0, %s69
      %s91 = sphi 0, %s93
      %s94 = sphi 0, %s91
      %s95 = sphi 0, %s94
      %s111 = sphi 0, %s95
      %s115 = sphi 0, %s115
      %s117 = sphi 0, %s115
      %s118 = sphi 0, %s117
      %s132 = sphi 0, %s118
      %s138 = sphi 0, %s140
      %s141 = sphi 0, %s138
      %s142 = sphi 0, %s141
      %s158 = sphi 0, %s142
      %s162 = sphi 0, %s162
      %s164 = sphi 0, %s162
      %s165 = sphi 0, %s164
      %s179 = sphi 0, %s165
      %s183 = sphi 0, %s183
      %s185 = sphi 0, %s183
      %s186 = sphi 0, %s185
      %s200 = sphi 0, %s186
      %s204 = sphi 0, %s204
      %s206 = sphi 0, %s204
      %s207 = sphi 0, %s206
      %s221 = sphi 0, %s207
      %s225 = sphi 0, %s225
      %s227 = sphi 0, %s225
      %s228 = sphi 0, %s227
      %s242 = sphi 0, %s228
    $region4: #{tpu_custom_call.1} parent=1 // loop_header_branch
      %18 = sbr.rel (%p16) target = $region8
    $region5: #{tpu_custom_call.1} parent=1 // loop_body
      %s20 = ssub.s32 %s15, 1
      %s21 = ssub.s32 %s15, 2
      %s28 = sadd.s32 1, %s23
      %p29 = scmp.ge.s32.totalorder %s28, 2
      %s30 = scalar_select %p29, 0, %s28
      %s31 = sadd.s32 1, %s22
      %s32 = scalar_select %p29, %s31, %s22
      %p33 = scmp.ge.s32.totalorder %s32, 2
      %s34 = scalar_select %p33, 0, %s32
      %s35 = ssub.s32 %s22, %s34
      %s36 = ssub.s32 %s23, %s30
      %s37 = sor.u32 %s35, %s36
      %p38 = scmp.eq.s32.totalorder %s37, 0
      %s40 = sadd.s32 %s39, 1
      %s41 = scalar_select %p38, %s39, %s40
      %p44 = pneg %p38
      %p45 = scmp.eq.s32.totalorder %s15, 3
      %p46 = por %p44, %p45
      %p47 = scmp.ne.s32.totalorder %s39, %s42
      %p48 = scmp.eq.s32.totalorder %s15, 0
      %p49 = por %p47, %p48
      %p50 = scmp.ne.s32.totalorder %s39, %s42
      %p51 = scmp.eq.s32.totalorder %s20, 3
      %p52 = por %p50, %p51
      %p53 = scmp.ne.s32.totalorder %s42, %s43
      %p54 = scmp.eq.s32.totalorder %s20, 0
      %p55 = por %p53, %p54
      %p56 = scmp.ne.s32.totalorder %s42, %s43
      %p57 = scmp.eq.s32.totalorder %s21, 3
      %p58 = por %p56, %p57
      %p60 = scmp.ne.s32.totalorder %s43, %s59
      %p61 = scmp.eq.s32.totalorder %s21, 0
      %p62 = por %p60, %p61
      %s63 = ssub.s32 %s22, %s34
      %p64 = scmp.eq.s32.totalorder %s63, 0
      %s66 = sadd.s32 %s65, 1
      %s67 = scalar_select %p64, %s65, %s66
      %p70 = pneg %p64
      %p71 = scmp.eq.s32.totalorder %s15, 3
      %p72 = por %p70, %p71
      %p73 = scmp.ne.s32.totalorder %s65, %s68
      %p74 = scmp.eq.s32.totalorder %s15, 0
      %p75 = por %p73, %p74
      %p76 = scmp.ne.s32.totalorder %s65, %s68
      %p77 = scmp.eq.s32.totalorder %s20, 3
      %p78 = por %p76, %p77
      %p79 = scmp.ne.s32.totalorder %s68, %s69
      %p80 = scmp.eq.s32.totalorder %s20, 0
      %p81 = por %p79, %p80
      %p82 = scmp.ne.s32.totalorder %s68, %s69
      %p83 = scmp.eq.s32.totalorder %s21, 3
      %p84 = por %p82, %p83
      %p86 = scmp.ne.s32.totalorder %s69, %s85
      %p87 = scmp.eq.s32.totalorder %s21, 0
      %p88 = por %p86, %p87
      %s89 = ssub.s32 %s23, %s30
      %p90 = scmp.eq.s32.totalorder %s89, 0
      %s92 = sadd.s32 %s91, 1
      %s93 = scalar_select %p90, %s91, %s92
      %p96 = pneg %p90
      %p97 = scmp.eq.s32.totalorder %s15, 3
      %p98 = por %p96, %p97
      %p99 = scmp.ne.s32.totalorder %s91, %s94
      %p100 = scmp.eq.s32.totalorder %s15, 0
      %p101 = por %p99, %p100
      %p102 = scmp.ne.s32.totalorder %s91, %s94
      %p103 = scmp.eq.s32.totalorder %s20, 3
      %p104 = por %p102, %p103
      %p105 = scmp.ne.s32.totalorder %s94, %s95
      %p106 = scmp.eq.s32.totalorder %s20, 0
      %p107 = por %p105, %p106
      %p108 = scmp.ne.s32.totalorder %s94, %s95
      %p109 = scmp.eq.s32.totalorder %s21, 3
      %p110 = por %p108, %p109
      %p112 = scmp.ne.s32.totalorder %s95, %s111
      %p113 = scmp.eq.s32.totalorder %s21, 0
      %p114 = por %p112, %p113
      %s116 = sadd.s32 %s115, 1
      %p119 = scmp.eq.s32.totalorder %s15, 3
      %p120 = scmp.ne.s32.totalorder %s115, %s117
      %p121 = scmp.eq.s32.totalorder %s15, 0
      %p122 = por %p120, %p121
      %p123 = scmp.ne.s32.totalorder %s115, %s117
      %p124 = scmp.eq.s32.totalorder %s20, 3
      %p125 = por %p123, %p124
      %p126 = scmp.ne.s32.totalorder %s117, %s118
      %p127 = scmp.eq.s32.totalorder %s20, 0
      %p128 = por %p126, %p127
      %p129 = scmp.ne.s32.totalorder %s117, %s118
      %p130 = scmp.eq.s32.totalorder %s21, 3
      %p131 = por %p129, %p130
      %p133 = scmp.ne.s32.totalorder %s118, %s132
      %p134 = scmp.eq.s32.totalorder %s21, 0
      %p135 = por %p133, %p134
      %s136 = ssub.s32 %s22, %s34
      %p137 = scmp.eq.s32.totalorder %s136, 0
      %s139 = sadd.s32 %s138, 1
      %s140 = scalar_select %p137, %s138, %s139
      %p143 = pneg %p137
      %p144 = scmp.eq.s32.totalorder %s15, 3
      %p145 = por %p143, %p144
      %p146 = scmp.ne.s32.totalorder %s138, %s141
      %p147 = scmp.eq.s32.totalorder %s15, 0
      %p148 = por %p146, %p147
      %p149 = scmp.ne.s32.totalorder %s138, %s141
      %p150 = scmp.eq.s32.totalorder %s20, 3
      %p151 = por %p149, %p150
      %p152 = scmp.ne.s32.totalorder %s141, %s142
      %p153 = scmp.eq.s32.totalorder %s20, 0
      %p154 = por %p152, %p153
      %p155 = scmp.ne.s32.totalorder %s141, %s142
      %p156 = scmp.eq.s32.totalorder %s21, 3
      %p157 = por %p155, %p156
      %p159 = scmp.ne.s32.totalorder %s142, %s158
      %p160 = scmp.eq.s32.totalorder %s21, 0
      %p161 = por %p159, %p160
      %s163 = sadd.s32 %s162, 1
      %p166 = scmp.eq.s32.totalorder %s15, 3
      %p167 = scmp.ne.s32.totalorder %s162, %s164
      %p168 = scmp.eq.s32.totalorder %s15, 0
      %p169 = por %p167, %p168
      %p170 = scmp.ne.s32.totalorder %s162, %s164
      %p171 = scmp.eq.s32.totalorder %s20, 3
      %p172 = por %p170, %p171
      %p173 = scmp.ne.s32.totalorder %s164, %s165
      %p174 = scmp.eq.s32.totalorder %s20, 0
      %p175 = por %p173, %p174
      %p176 = scmp.ne.s32.totalorder %s164, %s165
      %p177 = scmp.eq.s32.totalorder %s21, 3
      %p178 = por %p176, %p177
      %p180 = scmp.ne.s32.totalorder %s165, %s179
      %p181 = scmp.eq.s32.totalorder %s21, 0
      %p182 = por %p180, %p181
      %s184 = sadd.s32 %s183, 1
      %p187 = scmp.eq.s32.totalorder %s15, 3
      %p188 = scmp.ne.s32.totalorder %s183, %s185
      %p189 = scmp.eq.s32.totalorder %s15, 0
      %p190 = por %p188, %p189
      %p191 = scmp.ne.s32.totalorder %s183, %s185
      %p192 = scmp.eq.s32.totalorder %s20, 3
      %p193 = por %p191, %p192
      %p194 = scmp.ne.s32.totalorder %s185, %s186
      %p195 = scmp.eq.s32.totalorder %s20, 0
      %p196 = por %p194, %p195
      %p197 = scmp.ne.s32.totalorder %s185, %s186
      %p198 = scmp.eq.s32.totalorder %s21, 3
      %p199 = por %p197, %p198
      %p201 = scmp.ne.s32.totalorder %s186, %s200
      %p202 = scmp.eq.s32.totalorder %s21, 0
      %p203 = por %p201, %p202
      %s205 = sadd.s32 %s204, 1
      %p208 = scmp.eq.s32.totalorder %s15, 3
      %p209 = scmp.ne.s32.totalorder %s204, %s206
      %p210 = scmp.eq.s32.totalorder %s15, 0
      %p211 = por %p209, %p210
      %p212 = scmp.ne.s32.totalorder %s204, %s206
      %p213 = scmp.eq.s32.totalorder %s20, 3
      %p214 = por %p212, %p213
      %p215 = scmp.ne.s32.totalorder %s206, %s207
      %p216 = scmp.eq.s32.totalorder %s20, 0
      %p217 = por %p215, %p216
      %p218 = scmp.ne.s32.totalorder %s206, %s207
      %p219 = scmp.eq.s32.totalorder %s21, 3
      %p220 = por %p218, %p219
      %p222 = scmp.ne.s32.totalorder %s207, %s221
      %p223 = scmp.eq.s32.totalorder %s21, 0
      %p224 = por %p222, %p223
      %s226 = sadd.s32 %s225, 1
      %p229 = scmp.eq.s32.totalorder %s15, 3
      %p230 = scmp.ne.s32.totalorder %s225, %s227
      %p231 = scmp.eq.s32.totalorder %s15, 0
      %p232 = por %p230, %p231
      %p233 = scmp.ne.s32.totalorder %s225, %s227
      %p234 = scmp.eq.s32.totalorder %s20, 3
      %p235 = por %p233, %p234
      %p236 = scmp.ne.s32.totalorder %s227, %s228
      %p237 = scmp.eq.s32.totalorder %s20, 0
      %p238 = por %p236, %p237
      %p239 = scmp.ne.s32.totalorder %s227, %s228
      %p240 = scmp.eq.s32.totalorder %s21, 3
      %p241 = por %p239, %p240
      %p243 = scmp.ne.s32.totalorder %s228, %s242
      %p244 = scmp.eq.s32.totalorder %s21, 0
      %p245 = por %p243, %p244
      %p246 = scmp.le.s32.totalorder 1, %s15
      %p247 = scmp.lt.s32.totalorder %s15, 5
      %p248 = pnand %p246, %p247
      %p249 = pneg %p248
      // Predicated region
      $region9: #{tpu_custom_call.1} parent=5 // pred_check
        _
      $region10: #{tpu_custom_call.1} parent=5 // pred_check_branch
        %251 = sbr.rel (%p248) target = $region12
      $region11: #{tpu_custom_call.1} parent=5 // pred_region
        %s252 = ssub.s32 %s15, 1
        // Predicated region
        $region13: #{tpu_custom_call.1} parent=11 // pred_check
          %p253 = pneg %p128
        $region14: #{tpu_custom_call.1} parent=11 // pred_check_branch
          %255 = sbr.rel (%p253) target = $region16
        $region15: #{tpu_custom_call.1} parent=11 // pred_region
          _
        $region16: #{tpu_custom_call.1} parent=11 // pred_fallthru
          _
        // Predicated region
        $region17: #{tpu_custom_call.1} parent=11 // pred_check
          %p256 = pneg %p175
        $region18: #{tpu_custom_call.1} parent=11 // pred_check_branch
          %258 = sbr.rel (%p256) target = $region20
        $region19: #{tpu_custom_call.1} parent=11 // pred_region
          _
        $region20: #{tpu_custom_call.1} parent=11 // pred_fallthru
          _
        // Predicated region
        $region21: #{tpu_custom_call.1} parent=11 // pred_check
          %p259 = pneg %p196
        $region22: #{tpu_custom_call.1} parent=11 // pred_check_branch
          %261 = sbr.rel (%p259) target = $region24
        $region23: #{tpu_custom_call.1} parent=11 // pred_region
          _
        $region24: #{tpu_custom_call.1} parent=11 // pred_fallthru
          _
        // Predicated region
        $region25: #{tpu_custom_call.1} parent=11 // pred_check
          %p262 = pneg %p217
        $region26: #{tpu_custom_call.1} parent=11 // pred_check_branch
          %264 = sbr.rel (%p262) target = $region28
        $region27: #{tpu_custom_call.1} parent=11 // pred_region
          _
        $region28: #{tpu_custom_call.1} parent=11 // pred_fallthru
          _
      $region12: #{tpu_custom_call.1} parent=5 // pred_fallthru
        _
      %p265 = scmp.lt.s32.totalorder %s15, 4
      // Predicated region
      $region29: #{tpu_custom_call.1} parent=5 // pred_check
        %p266 = pneg %p265
      $region30: #{tpu_custom_call.1} parent=5 // pred_check_branch
        %268 = sbr.rel (%p266) target = $region32
      $region31: #{tpu_custom_call.1} parent=5 // pred_region
        // Predicated region
        $region33: #{tpu_custom_call.1} parent=31 // pred_check
          %p269 = pneg %p49
        $region34: #{tpu_custom_call.1} parent=31 // pred_check_branch
          %271 = sbr.rel (%p269) target = $region36
        $region35: #{tpu_custom_call.1} parent=31 // pred_region
          %s272 = sand.u32 %s39, 1
          %s273 = sand.u32 %s39, 1
          %s274 = smul.addr %s273, 128
          %s275 = scalar_lea.vmem [#allocation4], %s274
          %s276 = smul.u32 8, %s22
          %s277 = smul.u32 2, %s23
          %s278 = smul.addr %s276, 4
          %s279 = sadd.s32 %s277, %s278
          %s280 = smul.addr %s279, 8
          %s281 = scalar_lea.vmem %s0, %s280
          // Predicated region
          $region37: #{tpu_custom_call.1} parent=35 // pred_check
            _
          $region38: #{tpu_custom_call.1} parent=35 // pred_check_branch
            %283 = sbr.rel (0) target = $region40
          $region39: #{tpu_custom_call.1} parent=35 // pred_region
            // Predicated region
            $region41: #{tpu_custom_call.1} parent=39 // pred_check
              _
            $region42: #{tpu_custom_call.1} parent=39 // pred_check_branch
              %285 = sbr.rel (0) target = $region44
            $region43: #{tpu_custom_call.1} parent=39 // pred_region
              loop: start=0, step=1, limit=1
              $region45: #{tpu_custom_call.1} parent=43 // loop_pre_header
                _
              $region46: #{tpu_custom_call.1} parent=43 // loop_header
                %s287 = sphi 0, %s291
                %p288 = scmp.ge.s32.totalorder %s287, 1
                %s292 = sphi %s281, %s281
                %s293 = sphi %s275, %s275
              $region47: #{tpu_custom_call.1} parent=43 // loop_header_branch
                %290 = sbr.rel (%p288) target = $region51
              $region48: #{tpu_custom_call.1} parent=43 // loop_body
                %v294 = vld [vmem:[%s292] sm:$0xff]
                %295 = vst [vmem:[%s293] sm:$0xff] %v294
                %v296 = vld [vmem:[%s292 + $0x8] sm:$0xff]
                %297 = vst [vmem:[%s293 + $0x8] sm:$0xff] %v296
                %v298 = vld [vmem:[%s292 + $0x20] sm:$0xff]
                %299 = vst [vmem:[%s293 + $0x10] sm:$0xff] %v298
                %v300 = vld [vmem:[%s292 + $0x28] sm:$0xff]
                %301 = vst [vmem:[%s293 + $0x18] sm:$0xff] %v300
                %v302 = vld [vmem:[%s292 + $0x40] sm:$0xff]
                %303 = vst [vmem:[%s293 + $0x20] sm:$0xff] %v302
                %v304 = vld [vmem:[%s292 + $0x48] sm:$0xff]
                %305 = vst [vmem:[%s293 + $0x28] sm:$0xff] %v304
                %v306 = vld [vmem:[%s292 + $0x60] sm:$0xff]
                %307 = vst [vmem:[%s293 + $0x30] sm:$0xff] %v306
                %v308 = vld [vmem:[%s292 + $0x68] sm:$0xff]
                %309 = vst [vmem:[%s293 + $0x38] sm:$0xff] %v308
                %v310 = vld [vmem:[%s292 + $0x80] sm:$0xff]
                %311 = vst [vmem:[%s293 + $0x40] sm:$0xff] %v310
                %v312 = vld [vmem:[%s292 + $0x88] sm:$0xff]
                %313 = vst [vmem:[%s293 + $0x48] sm:$0xff] %v312
                %v314 = vld [vmem:[%s292 + $0xa0] sm:$0xff]
                %315 = vst [vmem:[%s293 + $0x50] sm:$0xff] %v314
                %v316 = vld [vmem:[%s292 + $0xa8] sm:$0xff]
                %317 = vst [vmem:[%s293 + $0x58] sm:$0xff] %v316
                %v318 = vld [vmem:[%s292 + $0xc0] sm:$0xff]
                %319 = vst [vmem:[%s293 + $0x60] sm:$0xff] %v318
                %v320 = vld [vmem:[%s292 + $0xc8] sm:$0xff]
                %321 = vst [vmem:[%s293 + $0x68] sm:$0xff] %v320
                %v322 = vld [vmem:[%s292 + $0xe0] sm:$0xff]
                %323 = vst [vmem:[%s293 + $0x70] sm:$0xff] %v322
                %v324 = vld [vmem:[%s292 + $0xe8] sm:$0xff]
                %325 = vst [vmem:[%s293 + $0x78] sm:$0xff] %v324
              $region49: #{tpu_custom_call.1} parent=43 // loop_footer
                %s291 = sadd.s32 1, %s287
              $region50: #{tpu_custom_call.1} parent=43 // loop_footer_branch
                %286 = sbr.rel target = $region46
              $region51: #{tpu_custom_call.1} parent=43 // loop_exit
                _
            $region44: #{tpu_custom_call.1} parent=39 // pred_fallthru
              _
            // Predicated region
            $region52: #{tpu_custom_call.1} parent=39 // pred_check
              _
            $region53: #{tpu_custom_call.1} parent=39 // pred_check_branch
              %327 = sbr.rel target = $region55
            $region54: #{tpu_custom_call.1} parent=39 // pred_region
              _
            $region55: #{tpu_custom_call.1} parent=39 // pred_fallthru
              _
          $region40: #{tpu_custom_call.1} parent=35 // pred_fallthru
            _
          %328 = vnop
        $region36: #{tpu_custom_call.1} parent=31 // pred_fallthru
          _
        // Predicated region
        $region56: #{tpu_custom_call.1} parent=31 // pred_check
          %p329 = pneg %p75
        $region57: #{tpu_custom_call.1} parent=31 // pred_check_branch
          %331 = sbr.rel (%p329) target = $region59
        $region58: #{tpu_custom_call.1} parent=31 // pred_region
          %s332 = smul.u32 32, %s22
          %p333 = scmp.lt.s32.totalorder %s332, 63
          %s334 = scalar_select %p333, %s332, 63
          %s335 = smul.addr %s334, 8
          %s336 = scalar_lea.vmem %s1, %s335
          %s337 = smul.u32 32, %s22
        $region59: #{tpu_custom_call.1} parent=31 // pred_fallthru
          _
        // Predicated region
        $region60: #{tpu_custom_call.1} parent=31 // pred_check
          %p338 = pneg %p101
        $region61: #{tpu_custom_call.1} parent=31 // pred_check_branch
          %340 = sbr.rel (%p338) target = $region63
        $region62: #{tpu_custom_call.1} parent=31 // pred_region
          %s341 = smul.u32 32, %s23
          %p342 = scmp.lt.s32.totalorder %s341, 63
          %s343 = scalar_select %p342, %s341, 63
          %s344 = smul.addr %s343, 4
          %s345 = scalar_lea.vmem %s2, %s344
          %s346 = smul.u32 32, %s23
        $region63: #{tpu_custom_call.1} parent=31 // pred_fallthru
          _
        // Predicated region
        $region64: #{tpu_custom_call.1} parent=31 // pred_check
          %p347 = pneg %p148
        $region65: #{tpu_custom_call.1} parent=31 // pred_check_branch
          %349 = sbr.rel (%p347) target = $region67
        $region66: #{tpu_custom_call.1} parent=31 // pred_region
          %s350 = sand.u32 %s138, 1
          %s351 = sand.u32 %s138, 1
          %s352 = smul.addr %s351, 128
          %s353 = scalar_lea.vmem [#allocation5], %s352
          %s354 = smul.u32 2, %s22
          %s355 = smul.addr %s354, 8
          %s356 = scalar_lea.vmem %s4, %s355
          // Predicated region
          $region68: #{tpu_custom_call.1} parent=66 // pred_check
            _
          $region69: #{tpu_custom_call.1} parent=66 // pred_check_branch
            %358 = sbr.rel (0) target = $region71
          $region70: #{tpu_custom_call.1} parent=66 // pred_region
            // Predicated region
            $region72: #{tpu_custom_call.1} parent=70 // pred_check
              _
            $region73: #{tpu_custom_call.1} parent=70 // pred_check_branch
              %360 = sbr.rel (0) target = $region75
            $region74: #{tpu_custom_call.1} parent=70 // pred_region
              loop: start=0, step=1, limit=1
              $region76: #{tpu_custom_call.1} parent=74 // loop_pre_header
                _
              $region77: #{tpu_custom_call.1} parent=74 // loop_header
                %s362 = sphi 0, %s366
                %p363 = scmp.ge.s32.totalorder %s362, 1
                %s367 = sphi %s356, %s356
                %s368 = sphi %s353, %s353
              $region78: #{tpu_custom_call.1} parent=74 // loop_header_branch
                %365 = sbr.rel (%p363) target = $region82
              $region79: #{tpu_custom_call.1} parent=74 // loop_body
                %v369 = vld [vmem:[%s367] sm:$0xff]
                %370 = vst [vmem:[%s368] sm:$0xff] %v369
                %v371 = vld [vmem:[%s367 + $0x8] sm:$0xff]
                %372 = vst [vmem:[%s368 + $0x8] sm:$0xff] %v371
                %v373 = vld [vmem:[%s367 + $0x20] sm:$0xff]
                %374 = vst [vmem:[%s368 + $0x10] sm:$0xff] %v373
                %v375 = vld [vmem:[%s367 + $0x28] sm:$0xff]
                %376 = vst [vmem:[%s368 + $0x18] sm:$0xff] %v375
                %v377 = vld [vmem:[%s367 + $0x40] sm:$0xff]
                %378 = vst [vmem:[%s368 + $0x20] sm:$0xff] %v377
                %v379 = vld [vmem:[%s367 + $0x48] sm:$0xff]
                %380 = vst [vmem:[%s368 + $0x28] sm:$0xff] %v379
                %v381 = vld [vmem:[%s367 + $0x60] sm:$0xff]
                %382 = vst [vmem:[%s368 + $0x30] sm:$0xff] %v381
                %v383 = vld [vmem:[%s367 + $0x68] sm:$0xff]
                %384 = vst [vmem:[%s368 + $0x38] sm:$0xff] %v383
                %v385 = vld [vmem:[%s367 + $0x80] sm:$0xff]
                %386 = vst [vmem:[%s368 + $0x40] sm:$0xff] %v385
                %v387 = vld [vmem:[%s367 + $0x88] sm:$0xff]
                %388 = vst [vmem:[%s368 + $0x48] sm:$0xff] %v387
                %v389 = vld [vmem:[%s367 + $0xa0] sm:$0xff]
                %390 = vst [vmem:[%s368 + $0x50] sm:$0xff] %v389
                %v391 = vld [vmem:[%s367 + $0xa8] sm:$0xff]
                %392 = vst [vmem:[%s368 + $0x58] sm:$0xff] %v391
                %v393 = vld [vmem:[%s367 + $0xc0] sm:$0xff]
                %394 = vst [vmem:[%s368 + $0x60] sm:$0xff] %v393
                %v395 = vld [vmem:[%s367 + $0xc8] sm:$0xff]
                %396 = vst [vmem:[%s368 + $0x68] sm:$0xff] %v395
                %v397 = vld [vmem:[%s367 + $0xe0] sm:$0xff]
                %398 = vst [vmem:[%s368 + $0x70] sm:$0xff] %v397
                %v399 = vld [vmem:[%s367 + $0xe8] sm:$0xff]
                %400 = vst [vmem:[%s368 + $0x78] sm:$0xff] %v399
              $region80: #{tpu_custom_call.1} parent=74 // loop_footer
                %s366 = sadd.s32 1, %s362
              $region81: #{tpu_custom_call.1} parent=74 // loop_footer_branch
                %361 = sbr.rel target = $region77
              $region82: #{tpu_custom_call.1} parent=74 // loop_exit
                _
            $region75: #{tpu_custom_call.1} parent=70 // pred_fallthru
              _
            // Predicated region
            $region83: #{tpu_custom_call.1} parent=70 // pred_check
              _
            $region84: #{tpu_custom_call.1} parent=70 // pred_check_branch
              %402 = sbr.rel target = $region86
            $region85: #{tpu_custom_call.1} parent=70 // pred_region
              _
            $region86: #{tpu_custom_call.1} parent=70 // pred_fallthru
              _
          $region71: #{tpu_custom_call.1} parent=66 // pred_fallthru
            _
          %403 = vnop
        $region67: #{tpu_custom_call.1} parent=31 // pred_fallthru
          _
      $region32: #{tpu_custom_call.1} parent=5 // pred_fallthru
        _
      %p404 = scmp.le.s32.totalorder 1, %s15
      %p405 = scmp.lt.s32.totalorder %s15, 5
      %p406 = pnand %p404, %p405
      %p407 = pneg %p406
      // Predicated region
      $region87: #{tpu_custom_call.1} parent=5 // pred_check
        _
      $region88: #{tpu_custom_call.1} parent=5 // pred_check_branch
        %409 = sbr.rel (%p406) target = $region90
      $region89: #{tpu_custom_call.1} parent=5 // pred_region
        %s410 = ssub.s32 %s15, 1
        %s411 = sand.u32 %s42, 1
        %s412 = sand.u32 %s42, 1
        %s413 = smul.addr %s412, 128
        %s414 = scalar_lea.vmem [#allocation4], %s413
        // Predicated region
        $region91: #{tpu_custom_call.1} parent=89 // pred_check
          %p415 = pneg %p55
        $region92: #{tpu_custom_call.1} parent=89 // pred_check_branch
          %417 = sbr.rel (%p415) target = $region94
        $region93: #{tpu_custom_call.1} parent=89 // pred_region
          _
        $region94: #{tpu_custom_call.1} parent=89 // pred_fallthru
          _
        %s418 = sand.u32 %s141, 1
        %s419 = sand.u32 %s141, 1
        %s420 = smul.addr %s419, 128
        %s421 = scalar_lea.vmem [#allocation5], %s420
        // Predicated region
        $region95: #{tpu_custom_call.1} parent=89 // pred_check
          %p422 = pneg %p154
        $region96: #{tpu_custom_call.1} parent=89 // pred_check_branch
          %424 = sbr.rel (%p422) target = $region98
        $region97: #{tpu_custom_call.1} parent=89 // pred_region
          _
        $region98: #{tpu_custom_call.1} parent=89 // pred_fallthru
          _
        %s425 = sand.u32 %s42, 1
        %s426 = sand.u32 %s42, 1
        %s427 = smul.addr %s426, 128
        %s428 = scalar_lea.vmem [#allocation4], %s427
        %p429 = pneg %p55
        %p430 = pneg %p52
        %s431 = smul.u32 32, %s24
        %p432 = scmp.lt.s32.totalorder %s431, 63
        %s433 = scalar_select %p432, %s431, 63
        %s434 = smul.addr %s433, 8
        %s435 = scalar_lea.vmem %s1, %s434
        %p436 = pneg %p81
        %p437 = pneg %p78
        %s438 = smul.u32 32, %s25
        %p439 = scmp.lt.s32.totalorder %s438, 63
        %s440 = scalar_select %p439, %s438, 63
        %s441 = smul.addr %s440, 4
        %s442 = scalar_lea.vmem %s2, %s441
        %p443 = pneg %p107
        %p444 = pneg %p104
        %p445 = pneg %p128
        %p446 = pneg %p125
        %s447 = sand.u32 %s141, 1
        %s448 = sand.u32 %s141, 1
        %s449 = smul.addr %s448, 128
        %s450 = scalar_lea.vmem [#allocation5], %s449
        %p451 = pneg %p154
        %p452 = pneg %p151
        %p453 = pneg %p175
        %p454 = pneg %p172
        %p455 = pneg %p196
        %p456 = pneg %p193
        %p457 = pneg %p217
        %p458 = pneg %p214
        %p459 = pneg %p238
        %p460 = pneg %p235
        %s461 = smul.u32 8, %s24
        %s462 = smul.u32 2, %s25
        %s463 = smul.u32 32, %s24
        %p464 = scmp.lt.s32.totalorder %s463, 63
        %s465 = scalar_select %p464, %s463, 63
        %s466 = smul.addr %s465, 8
        %s467 = scalar_lea.vmem %s1, %s466
        %s468 = smul.u32 32, %s24
        %s469 = smul.u32 32, %s25
        %p470 = scmp.lt.s32.totalorder %s469, 63
        %s471 = scalar_select %p470, %s469, 63
        %s472 = smul.addr %s471, 4
        %s473 = scalar_lea.vmem %s2, %s472
        %s474 = smul.u32 32, %s25
        %s475 = smul.u32 2, %s24
        %p477 = scmp.eq.s32.totalorder %s24, 0
        %p478 = scmp.eq.s32.totalorder %s25, 0
        %p479 = pnand %p477, %p478
        %p480 = pneg %p479
        // Predicated region
        $region99: #{tpu_custom_call.1} parent=89 // pred_check
          _
        $region100: #{tpu_custom_call.1} parent=89 // pred_check_branch
          %482 = sbr.rel (%p479) target = $region102
        $region101: #{tpu_custom_call.1} parent=89 // pred_region
          %483 = vst [vmem:[#allocation3] sm:$0xff] 0.0
          %484 = vst [vmem:[#allocation3 + $0x8] sm:$0xff] 0.0
          %485 = vst [vmem:[#allocation3 + $0x10] sm:$0xff] 0.0
          %486 = vst [vmem:[#allocation3 + $0x18] sm:$0xff] 0.0
          %487 = vst [vmem:[#allocation3 + $0x20] sm:$0xff] 0.0
          %488 = vst [vmem:[#allocation3 + $0x28] sm:$0xff] 0.0
          %489 = vst [vmem:[#allocation3 + $0x30] sm:$0xff] 0.0
          %490 = vst [vmem:[#allocation3 + $0x38] sm:$0xff] 0.0
          %491 = vst [vmem:[#allocation3 + $0x40] sm:$0xff] 0.0
          %492 = vst [vmem:[#allocation3 + $0x48] sm:$0xff] 0.0
          %493 = vst [vmem:[#allocation3 + $0x50] sm:$0xff] 0.0
          %494 = vst [vmem:[#allocation3 + $0x58] sm:$0xff] 0.0
          %495 = vst [vmem:[#allocation3 + $0x60] sm:$0xff] 0.0
          %496 = vst [vmem:[#allocation3 + $0x68] sm:$0xff] 0.0
          %497 = vst [vmem:[#allocation3 + $0x70] sm:$0xff] 0.0
          %498 = vst [vmem:[#allocation3 + $0x78] sm:$0xff] 0.0
          %499 = vst [vmem:[#allocation3 + $0x80] sm:$0xff] 0.0
          %500 = vst [vmem:[#allocation3 + $0x88] sm:$0xff] 0.0
          %501 = vst [vmem:[#allocation3 + $0x90] sm:$0xff] 0.0
          %502 = vst [vmem:[#allocation3 + $0x98] sm:$0xff] 0.0
          %503 = vst [vmem:[#allocation3 + $0xa0] sm:$0xff] 0.0
          %504 = vst [vmem:[#allocation3 + $0xa8] sm:$0xff] 0.0
          %505 = vst [vmem:[#allocation3 + $0xb0] sm:$0xff] 0.0
          %506 = vst [vmem:[#allocation3 + $0xb8] sm:$0xff] 0.0
          %507 = vst [vmem:[#allocation3 + $0xc0] sm:$0xff] 0.0
          %508 = vst [vmem:[#allocation3 + $0xc8] sm:$0xff] 0.0
          %509 = vst [vmem:[#allocation3 + $0xd0] sm:$0xff] 0.0
          %510 = vst [vmem:[#allocation3 + $0xd8] sm:$0xff] 0.0
          %511 = vst [vmem:[#allocation3 + $0xe0] sm:$0xff] 0.0
          %512 = vst [vmem:[#allocation3 + $0xe8] sm:$0xff] 0.0
          %513 = vst [vmem:[#allocation3 + $0xf0] sm:$0xff] 0.0
          %514 = vst [vmem:[#allocation3 + $0xf8] sm:$0xff] 0.0
        $region102: #{tpu_custom_call.1} parent=89 // pred_fallthru
          _
        // Predicated region
        $region103: #{tpu_custom_call.1} parent=89 // pred_check
          %p515 = pneg %p478
        $region104: #{tpu_custom_call.1} parent=89 // pred_check_branch
          %517 = sbr.rel (%p515) target = $region106
        $region105: #{tpu_custom_call.1} parent=89 // pred_region
          %vm518 = vcmask 261120
          %519 = vst.msk [vmem:[#allocation2] sm:$0xff] %vm518, 0.0
          %520 = vst.msk [vmem:[#allocation2 + $0x8] sm:$0xff] %vm518, 0.0
          %521 = vst.msk [vmem:[#allocation2 + $0x10] sm:$0xff] %vm518, 0.0
          %522 = vst.msk [vmem:[#allocation2 + $0x18] sm:$0xff] %vm518, 0.0
          %523 = vst.msk [vmem:[#allocation2 + $0x20] sm:$0xff] %vm518, 0.0
          %524 = vst.msk [vmem:[#allocation2 + $0x28] sm:$0xff] %vm518, 0.0
          %525 = vst.msk [vmem:[#allocation2 + $0x30] sm:$0xff] %vm518, 0.0
          %526 = vst.msk [vmem:[#allocation2 + $0x38] sm:$0xff] %vm518, 0.0
          %527 = vst.msk [vmem:[#allocation2 + $0x40] sm:$0xff] %vm518, 0.0
          %528 = vst.msk [vmem:[#allocation2 + $0x48] sm:$0xff] %vm518, 0.0
          %529 = vst.msk [vmem:[#allocation2 + $0x50] sm:$0xff] %vm518, 0.0
          %530 = vst.msk [vmem:[#allocation2 + $0x58] sm:$0xff] %vm518, 0.0
          %531 = vst.msk [vmem:[#allocation2 + $0x60] sm:$0xff] %vm518, 0.0
          %532 = vst.msk [vmem:[#allocation2 + $0x68] sm:$0xff] %vm518, 0.0
          %533 = vst.msk [vmem:[#allocation2 + $0x70] sm:$0xff] %vm518, 0.0
          %534 = vst.msk [vmem:[#allocation2 + $0x78] sm:$0xff] %vm518, 0.0
          %535 = vst.msk [vmem:[#allocation2 + $0x80] sm:$0xff] %vm518, 0.0
          %536 = vst.msk [vmem:[#allocation2 + $0x88] sm:$0xff] %vm518, 0.0
          %537 = vst.msk [vmem:[#allocation2 + $0x90] sm:$0xff] %vm518, 0.0
          %538 = vst.msk [vmem:[#allocation2 + $0x98] sm:$0xff] %vm518, 0.0
          %539 = vst.msk [vmem:[#allocation2 + $0xa0] sm:$0xff] %vm518, 0.0
          %540 = vst.msk [vmem:[#allocation2 + $0xa8] sm:$0xff] %vm518, 0.0
          %541 = vst.msk [vmem:[#allocation2 + $0xb0] sm:$0xff] %vm518, 0.0
          %542 = vst.msk [vmem:[#allocation2 + $0xb8] sm:$0xff] %vm518, 0.0
          %543 = vst.msk [vmem:[#allocation2 + $0xc0] sm:$0xff] %vm518, 0.0
          %544 = vst.msk [vmem:[#allocation2 + $0xc8] sm:$0xff] %vm518, 0.0
          %545 = vst.msk [vmem:[#allocation2 + $0xd0] sm:$0xff] %vm518, 0.0
          %546 = vst.msk [vmem:[#allocation2 + $0xd8] sm:$0xff] %vm518, 0.0
          %547 = vst.msk [vmem:[#allocation2 + $0xe0] sm:$0xff] %vm518, 0.0
          %548 = vst.msk [vmem:[#allocation2 + $0xe8] sm:$0xff] %vm518, 0.0
          %549 = vst.msk [vmem:[#allocation2 + $0xf0] sm:$0xff] %vm518, 0.0
          %550 = vst.msk [vmem:[#allocation2 + $0xf8] sm:$0xff] %vm518, 0.0
        $region106: #{tpu_custom_call.1} parent=89 // pred_fallthru
          _
        %v551 = vld [vmem:[#allocation2] sm:$0xff]
        %v552 = vld [vmem:[#allocation2 + $0x8] sm:$0xff]
        %v553 = vld [vmem:[#allocation2 + $0x10] sm:$0xff]
        %v554 = vld [vmem:[#allocation2 + $0x18] sm:$0xff]
        %v555 = vld [vmem:[#allocation2 + $0x20] sm:$0xff]
        %v556 = vld [vmem:[#allocation2 + $0x28] sm:$0xff]
        %v557 = vld [vmem:[#allocation2 + $0x30] sm:$0xff]
        %v558 = vld [vmem:[#allocation2 + $0x38] sm:$0xff]
        %v559 = vld [vmem:[#allocation2 + $0x40] sm:$0xff]
        %v560 = vld [vmem:[#allocation2 + $0x48] sm:$0xff]
        %v561 = vld [vmem:[#allocation2 + $0x50] sm:$0xff]
        %v562 = vld [vmem:[#allocation2 + $0x58] sm:$0xff]
        %v563 = vld [vmem:[#allocation2 + $0x60] sm:$0xff]
        %v564 = vld [vmem:[#allocation2 + $0x68] sm:$0xff]
        %v565 = vld [vmem:[#allocation2 + $0x70] sm:$0xff]
        %v566 = vld [vmem:[#allocation2 + $0x78] sm:$0xff]
        %v567 = vld [vmem:[#allocation2 + $0x80] sm:$0xff]
        %v568 = vld [vmem:[#allocation2 + $0x88] sm:$0xff]
        %v569 = vld [vmem:[#allocation2 + $0x90] sm:$0xff]
        %v570 = vld [vmem:[#allocation2 + $0x98] sm:$0xff]
        %v571 = vld [vmem:[#allocation2 + $0xa0] sm:$0xff]
        %v572 = vld [vmem:[#allocation2 + $0xa8] sm:$0xff]
        %v573 = vld [vmem:[#allocation2 + $0xb0] sm:$0xff]
        %v574 = vld [vmem:[#allocation2 + $0xb8] sm:$0xff]
        %v575 = vld [vmem:[#allocation2 + $0xc0] sm:$0xff]
        %v576 = vld [vmem:[#allocation2 + $0xc8] sm:$0xff]
        %v577 = vld [vmem:[#allocation2 + $0xd0] sm:$0xff]
        %v578 = vld [vmem:[#allocation2 + $0xd8] sm:$0xff]
        %v579 = vld [vmem:[#allocation2 + $0xe0] sm:$0xff]
        %v580 = vld [vmem:[#allocation2 + $0xe8] sm:$0xff]
        %v581 = vld [vmem:[#allocation2 + $0xf0] sm:$0xff]
        %v582 = vld [vmem:[#allocation2 + $0xf8] sm:$0xff]
        %v583 = vld [vmem:[%s414] sm:$0xff]
        %v584 = vld [vmem:[%s414 + $0x8] sm:$0xff]
        %v585 = vld [vmem:[%s414 + $0x10] sm:$0xff]
        %v586 = vld [vmem:[%s414 + $0x18] sm:$0xff]
        %v587 = vld [vmem:[%s414 + $0x20] sm:$0xff]
        %v588 = vld [vmem:[%s414 + $0x28] sm:$0xff]
        %v589 = vld [vmem:[%s414 + $0x30] sm:$0xff]
        %v590 = vld [vmem:[%s414 + $0x38] sm:$0xff]
        %v591 = vld [vmem:[%s414 + $0x40] sm:$0xff]
        %v592 = vld [vmem:[%s414 + $0x48] sm:$0xff]
        %v593 = vld [vmem:[%s414 + $0x50] sm:$0xff]
        %v594 = vld [vmem:[%s414 + $0x58] sm:$0xff]
        %v595 = vld [vmem:[%s414 + $0x60] sm:$0xff]
        %v596 = vld [vmem:[%s414 + $0x68] sm:$0xff]
        %v597 = vld [vmem:[%s414 + $0x70] sm:$0xff]
        %v598 = vld [vmem:[%s414 + $0x78] sm:$0xff]
        %v599 = vunpack.c.l.s8.bf16 %v583
        %v600 = vunpack.c.l.s8.bf16 %v584
        %v601 = vunpack.c.h.s8.bf16 %v583
        %v602 = vunpack.c.h.s8.bf16 %v584
        %v603 = vunpack.c.l.s8.bf16 %v585
        %v604 = vunpack.c.l.s8.bf16 %v586
        %v605 = vunpack.c.h.s8.bf16 %v585
        %v606 = vunpack.c.h.s8.bf16 %v586
        %v607 = vunpack.c.l.s8.bf16 %v587
        %v608 = vunpack.c.l.s8.bf16 %v588
        %v609 = vunpack.c.h.s8.bf16 %v587
        %v610 = vunpack.c.h.s8.bf16 %v588
        %v611 = vunpack.c.l.s8.bf16 %v589
        %v612 = vunpack.c.l.s8.bf16 %v590
        %v613 = vunpack.c.h.s8.bf16 %v589
        %v614 = vunpack.c.h.s8.bf16 %v590
        %v615 = vunpack.c.l.s8.bf16 %v591
        %v616 = vunpack.c.l.s8.bf16 %v592
        %v617 = vunpack.c.h.s8.bf16 %v591
        %v618 = vunpack.c.h.s8.bf16 %v592
        %v619 = vunpack.c.l.s8.bf16 %v593
        %v620 = vunpack.c.l.s8.bf16 %v594
        %v621 = vunpack.c.h.s8.bf16 %v593
        %v622 = vunpack.c.h.s8.bf16 %v594
        %v623 = vunpack.c.l.s8.bf16 %v595
        %v624 = vunpack.c.l.s8.bf16 %v596
        %v625 = vunpack.c.h.s8.bf16 %v595
        %v626 = vunpack.c.h.s8.bf16 %v596
        %v627 = vunpack.c.l.s8.bf16 %v597
        %v628 = vunpack.c.l.s8.bf16 %v598
        %v629 = vunpack.c.h.s8.bf16 %v597
        %v630 = vunpack.c.h.s8.bf16 %v598
        %v631 = vld [vmem:[%s473] sm:$0xf]
        %v632 = vld [vmem:[%s473 + $0x4] sm:$0xf]
        %v633 = vld [vmem:[%s473 + $0x8] sm:$0xf]
        %v634 = vld [vmem:[%s473 + $0xc] sm:$0xf]
        %v635 = vld [vmem:[%s473 + $0x10] sm:$0xf]
        %v636 = vld [vmem:[%s473 + $0x14] sm:$0xf]
        %v637 = vld [vmem:[%s473 + $0x18] sm:$0xf]
        %v638 = vld [vmem:[%s473 + $0x1c] sm:$0xf]
        %v639 = vld [vmem:[%s473 + $0x20] sm:$0xf]
        %v640 = vld [vmem:[%s473 + $0x24] sm:$0xf]
        %v641 = vld [vmem:[%s473 + $0x28] sm:$0xf]
        %v642 = vld [vmem:[%s473 + $0x2c] sm:$0xf]
        %v643 = vld [vmem:[%s473 + $0x30] sm:$0xf]
        %v644 = vld [vmem:[%s473 + $0x34] sm:$0xf]
        %v645 = vld [vmem:[%s473 + $0x38] sm:$0xf]
        %v646 = vld [vmem:[%s473 + $0x3c] sm:$0xf]
        %v647 = vld [vmem:[%s473 + $0x40] sm:$0xf]
        %v648 = vld [vmem:[%s473 + $0x44] sm:$0xf]
        %v649 = vld [vmem:[%s473 + $0x48] sm:$0xf]
        %v650 = vld [vmem:[%s473 + $0x4c] sm:$0xf]
        %v651 = vld [vmem:[%s473 + $0x50] sm:$0xf]
        %v652 = vld [vmem:[%s473 + $0x54] sm:$0xf]
        %v653 = vld [vmem:[%s473 + $0x58] sm:$0xf]
        %v654 = vld [vmem:[%s473 + $0x5c] sm:$0xf]
        %v655 = vld [vmem:[%s473 + $0x60] sm:$0xf]
        %v656 = vld [vmem:[%s473 + $0x64] sm:$0xf]
        %v657 = vld [vmem:[%s473 + $0x68] sm:$0xf]
        %v658 = vld [vmem:[%s473 + $0x6c] sm:$0xf]
        %v659 = vld [vmem:[%s473 + $0x70] sm:$0xf]
        %v660 = vld [vmem:[%s473 + $0x74] sm:$0xf]
        %v661 = vld [vmem:[%s473 + $0x78] sm:$0xf]
        %v662 = vld [vmem:[%s473 + $0x7c] sm:$0xf]
        %v695 = vunpack.c.l.b16 %v631
        %v696 = vunpack.c.l.b16 %v632
        %v697 = vunpack.c.l.b16 %v633
        %v698 = vunpack.c.l.b16 %v634
        %v699 = vunpack.c.l.b16 %v635
        %v700 = vunpack.c.l.b16 %v636
        %v701 = vunpack.c.l.b16 %v637
        %v702 = vunpack.c.l.b16 %v638
        %v703 = vunpack.c.l.b16 %v639
        %v704 = vunpack.c.l.b16 %v640
        %v705 = vunpack.c.l.b16 %v641
        %v706 = vunpack.c.l.b16 %v642
        %v707 = vunpack.c.l.b16 %v643
        %v708 = vunpack.c.l.b16 %v644
        %v709 = vunpack.c.l.b16 %v645
        %v710 = vunpack.c.l.b16 %v646
        %v711 = vunpack.c.l.b16 %v647
        %v712 = vunpack.c.l.b16 %v648
        %v713 = vunpack.c.l.b16 %v649
        %v714 = vunpack.c.l.b16 %v650
        %v715 = vunpack.c.l.b16 %v651
        %v716 = vunpack.c.l.b16 %v652
        %v717 = vunpack.c.l.b16 %v653
        %v718 = vunpack.c.l.b16 %v654
        %v719 = vunpack.c.l.b16 %v655
        %v720 = vunpack.c.l.b16 %v656
        %v721 = vunpack.c.l.b16 %v657
        %v722 = vunpack.c.l.b16 %v658
        %v723 = vunpack.c.l.b16 %v659
        %v724 = vunpack.c.l.b16 %v660
        %v725 = vunpack.c.l.b16 %v661
        %v726 = vunpack.c.l.b16 %v662
        %v727 = vpack.c.b16 %v696, %v695
        %v728 = vpack.c.b16 %v698, %v697
        %v729 = vpack.c.b16 %v700, %v699
        %v730 = vpack.c.b16 %v702, %v701
        %v731 = vpack.c.b16 %v704, %v703
        %v732 = vpack.c.b16 %v706, %v705
        %v733 = vpack.c.b16 %v708, %v707
        %v734 = vpack.c.b16 %v710, %v709
        %v735 = vpack.c.b16 %v712, %v711
        %v736 = vpack.c.b16 %v714, %v713
        %v737 = vpack.c.b16 %v716, %v715
        %v738 = vpack.c.b16 %v718, %v717
        %v739 = vpack.c.b16 %v720, %v719
        %v740 = vpack.c.b16 %v722, %v721
        %v741 = vpack.c.b16 %v724, %v723
        %v742 = vpack.c.b16 %v726, %v725
        %759 = vmatprep.subr.bf16.mxu0 0
        %760 = vmatpush1.bf16.msra.mxu0 %v727
        %761 = vmatprep.subr.bf16.mxu0 0
        %762 = vmatpush1.bf16.msra.mxu0 %v728
        %763 = vmatprep.subr.bf16.mxu0 0
        %764 = vmatpush1.bf16.msra.mxu0 %v729
        %765 = vmatprep.subr.bf16.mxu0 0
        %766 = vmatpush1.bf16.msra.mxu0 %v730
        %767 = vmatprep.subr.bf16.mxu0 0
        %768 = vmatpush1.bf16.msra.mxu0 %v731
        %769 = vmatprep.subr.bf16.mxu0 0
        %770 = vmatpush1.bf16.msra.mxu0 %v732
        %771 = vmatprep.subr.bf16.mxu0 0
        %772 = vmatpush1.bf16.msra.mxu0 %v733
        %773 = vmatprep.subr.bf16.mxu0 0
        %774 = vmatpush1.bf16.msra.mxu0 %v734
        %775 = vmatprep.subr.bf16.mxu0 0
        %776 = vmatpush1.bf16.msra.mxu0 %v735
        %777 = vmatprep.subr.bf16.mxu0 0
        %778 = vmatpush1.bf16.msra.mxu0 %v736
        %779 = vmatprep.subr.bf16.mxu0 0
        %780 = vmatpush1.bf16.msra.mxu0 %v737
        %781 = vmatprep.subr.bf16.mxu0 0
        %782 = vmatpush1.bf16.msra.mxu0 %v738
        %783 = vmatprep.subr.bf16.mxu0 0
        %784 = vmatpush1.bf16.msra.mxu0 %v739
        %785 = vmatprep.subr.bf16.mxu0 0
        %786 = vmatpush1.bf16.msra.mxu0 %v740
        %787 = vmatprep.subr.bf16.mxu0 0
        %788 = vmatpush1.bf16.msra.mxu0 %v741
        %789 = vmatprep.subr.bf16.mxu0 0
        %790 = vmatpush1.bf16.msra.mxu0 %v742
        %791 = vmatprep.mubr.bf16.mxu0 %v600
        %792 = vmatmul.mubr.bf16.gmra.mrb[0].mxu0 %v599
        %v793 = vpop.f32.mrb[0].mxu0
        %v794 = vadd.f32 0.0, %v793
        %v795 = vpop.f32.mrb[0].mxu0
        %v796 = vpop.f32.mrb[0].mxu0
        %v797 = vadd.f32 0.0, %v796
        %v798 = vpop.f32.mrb[0].mxu0
        %799 = vmatprep.mubr.bf16.mxu0 %v602
        %800 = vmatmul.mubr.bf16.gmra.mrb[0].mxu0 %v601
        %v801 = vpop.f32.mrb[0].mxu0
        %v802 = vadd.f32 0.0, %v801
        %v803 = vpop.f32.mrb[0].mxu0
        %v804 = vpop.f32.mrb[0].mxu0
        %v805 = vadd.f32 0.0, %v804
        %v806 = vpop.f32.mrb[0].mxu0
        %807 = vmatprep.mubr.bf16.mxu0 %v604
        %808 = vmatmul.mubr.bf16.gmra.mrb[0].mxu0 %v603
        %v809 = vpop.f32.mrb[0].mxu0
        %v810 = vadd.f32 0.0, %v809
        %v811 = vpop.f32.mrb[0].mxu0
        %v812 = vpop.f32.mrb[0].mxu0
        %v813 = vadd.f32 0.0, %v812
        %v814 = vpop.f32.mrb[0].mxu0
        %815 = vmatprep.mubr.bf16.mxu0 %v606
        %816 = vmatmul.mubr.bf16.gmra.mrb[0].mxu0 %v605
        %v817 = vpop.f32.mrb[0].mxu0
        %v818 = vadd.f32 0.0, %v817
        %v819 = vpop.f32.mrb[0].mxu0
        %v820 = vpop.f32.mrb[0].mxu0
        %v821 = vadd.f32 0.0, %v820
        %v822 = vpop.f32.mrb[0].mxu0
        %823 = vmatprep.mubr.bf16.mxu0 %v608
        %824 = vmatmul.mubr.bf16.gmra.mrb[0].mxu0 %v607
        %v825 = vpop.f32.mrb[0].mxu0
        %v826 = vadd.f32 0.0, %v825
        %v827 = vpop.f32.mrb[0].mxu0
        %v828 = vpop.f32.mrb[0].mxu0
        %v829 = vadd.f32 0.0, %v828
        %v830 = vpop.f32.mrb[0].mxu0
        %831 = vmatprep.mubr.bf16.mxu0 %v610
        %832 = vmatmul.mubr.bf16.gmra.mrb[0].mxu0 %v609
        %v833 = vpop.f32.mrb[0].mxu0
        %v834 = vadd.f32 0.0, %v833
        %v835 = vpop.f32.mrb[0].mxu0
        %v836 = vpop.f32.mrb[0].mxu0
        %v837 = vadd.f32 0.0, %v836
        %v838 = vpop.f32.mrb[0].mxu0
        %839 = vmatprep.mubr.bf16.mxu0 %v612
        %840 = vmatmul.mubr.bf16.gmra.mrb[0].mxu0 %v611
        %v841 = vpop.f32.mrb[0].mxu0
        %v842 = vadd.f32 0.0, %v841
        %v843 = vpop.f32.mrb[0].mxu0
        %v844 = vpop.f32.mrb[0].mxu0
        %v845 = vadd.f32 0.0, %v844
        %v846 = vpop.f32.mrb[0].mxu0
        %847 = vmatprep.mubr.bf16.mxu0 %v614
        %848 = vmatmul.mubr.bf16.gmra.mrb[0].mxu0 %v613
        %v849 = vpop.f32.mrb[0].mxu0
        %v850 = vadd.f32 0.0, %v849
        %v851 = vpop.f32.mrb[0].mxu0
        %v852 = vpop.f32.mrb[0].mxu0
        %v853 = vadd.f32 0.0, %v852
        %v854 = vpop.f32.mrb[0].mxu0
        %855 = vmatprep.mubr.bf16.mxu0 %v616
        %856 = vmatmul.mubr.bf16.gmra.mrb[0].mxu0 %v615
        %v857 = vpop.f32.mrb[0].mxu0
        %v858 = vadd.f32 0.0, %v857
        %v859 = vpop.f32.mrb[0].mxu0
        %v860 = vpop.f32.mrb[0].mxu0
        %v861 = vadd.f32 0.0, %v860
        %v862 = vpop.f32.mrb[0].mxu0
        %863 = vmatprep.mubr.bf16.mxu0 %v618
        %864 = vmatmul.mubr.bf16.gmra.mrb[0].mxu0 %v617
        %v865 = vpop.f32.mrb[0].mxu0
        %v866 = vadd.f32 0.0, %v865
        %v867 = vpop.f32.mrb[0].mxu0
        %v868 = vpop.f32.mrb[0].mxu0
        %v869 = vadd.f32 0.0, %v868
        %v870 = vpop.f32.mrb[0].mxu0
        %871 = vmatprep.mubr.bf16.mxu0 %v620
        %872 = vmatmul.mubr.bf16.gmra.mrb[0].mxu0 %v619
        %v873 = vpop.f32.mrb[0].mxu0
        %v874 = vadd.f32 0.0, %v873
        %v875 = vpop.f32.mrb[0].mxu0
        %v876 = vpop.f32.mrb[0].mxu0
        %v877 = vadd.f32 0.0, %v876
        %v878 = vpop.f32.mrb[0].mxu0
        %879 = vmatprep.mubr.bf16.mxu0 %v622
        %880 = vmatmul.mubr.bf16.gmra.mrb[0].mxu0 %v621
        %v881 = vpop.f32.mrb[0].mxu0
        %v882 = vadd.f32 0.0, %v881
        %v883 = vpop.f32.mrb[0].mxu0
        %v884 = vpop.f32.mrb[0].mxu0
        %v885 = vadd.f32 0.0, %v884
        %v886 = vpop.f32.mrb[0].mxu0
        %887 = vmatprep.mubr.bf16.mxu0 %v624
        %888 = vmatmul.mubr.bf16.gmra.mrb[0].mxu0 %v623
        %v889 = vpop.f32.mrb[0].mxu0
        %v890 = vadd.f32 0.0, %v889
        %v891 = vpop.f32.mrb[0].mxu0
        %v892 = vpop.f32.mrb[0].mxu0
        %v893 = vadd.f32 0.0, %v892
        %v894 = vpop.f32.mrb[0].mxu0
        %895 = vmatprep.mubr.bf16.mxu0 %v626
        %896 = vmatmul.mubr.bf16.gmra.mrb[0].mxu0 %v625
        %v897 = vpop.f32.mrb[0].mxu0
        %v898 = vadd.f32 0.0, %v897
        %v899 = vpop.f32.mrb[0].mxu0
        %v900 = vpop.f32.mrb[0].mxu0
        %v901 = vadd.f32 0.0, %v900
        %v902 = vpop.f32.mrb[0].mxu0
        %903 = vmatprep.mubr.bf16.mxu0 %v628
        %904 = vmatmul.mubr.bf16.gmra.mrb[0].mxu0 %v627
        %v905 = vpop.f32.mrb[0].mxu0
        %v906 = vadd.f32 0.0, %v905
        %v907 = vpop.f32.mrb[0].mxu0
        %v908 = vpop.f32.mrb[0].mxu0
        %v909 = vadd.f32 0.0, %v908
        %v910 = vpop.f32.mrb[0].mxu0
        %911 = vmatprep.mubr.bf16.mxu0 %v630
        %912 = vmatmul.mubr.bf16.gmra.mrb[0].mxu0 %v629
        %v913 = vpop.f32.mrb[0].mxu0
        %v914 = vadd.f32 0.0, %v913
        %v915 = vpop.f32.mrb[0].mxu0
        %v916 = vpop.f32.mrb[0].mxu0
        %v917 = vadd.f32 0.0, %v916
        %v918 = vpop.f32.mrb[0].mxu0
        %919 = vdwg.mxu0
        %v920 = vadd.f32 %v551, %v794
        %v921 = vadd.f32 %v552, %v797
        %v922 = vadd.f32 %v553, %v802
        %v923 = vadd.f32 %v554, %v805
        %v924 = vadd.f32 %v555, %v810
        %v925 = vadd.f32 %v556, %v813
        %v926 = vadd.f32 %v557, %v818
        %v927 = vadd.f32 %v558, %v821
        %v928 = vadd.f32 %v559, %v826
        %v929 = vadd.f32 %v560, %v829
        %v930 = vadd.f32 %v561, %v834
        %v931 = vadd.f32 %v562, %v837
        %v932 = vadd.f32 %v563, %v842
        %v933 = vadd.f32 %v564, %v845
        %v934 = vadd.f32 %v565, %v850
        %v935 = vadd.f32 %v566, %v853
        %v936 = vadd.f32 %v567, %v858
        %v937 = vadd.f32 %v568, %v861
        %v938 = vadd.f32 %v569, %v866
        %v939 = vadd.f32 %v570, %v869
        %v940 = vadd.f32 %v571, %v874
        %v941 = vadd.f32 %v572, %v877
        %v942 = vadd.f32 %v573, %v882
        %v943 = vadd.f32 %v574, %v885
        %v944 = vadd.f32 %v575, %v890
        %v945 = vadd.f32 %v576, %v893
        %v946 = vadd.f32 %v577, %v898
        %v947 = vadd.f32 %v578, %v901
        %v948 = vadd.f32 %v579, %v906
        %v949 = vadd.f32 %v580, %v909
        %v950 = vadd.f32 %v581, %v914
        %v951 = vadd.f32 %v582, %v917
        %vm952 = vcmask 261120
        %953 = vst.msk [vmem:[#allocation2] sm:$0xff] %vm952, %v920
        %954 = vst.msk [vmem:[#allocation2 + $0x8] sm:$0xff] %vm952, %v921
        %955 = vst.msk [vmem:[#allocation2 + $0x10] sm:$0xff] %vm952, %v922
        %956 = vst.msk [vmem:[#allocation2 + $0x18] sm:$0xff] %vm952, %v923
        %957 = vst.msk [vmem:[#allocation2 + $0x20] sm:$0xff] %vm952, %v924
        %958 = vst.msk [vmem:[#allocation2 + $0x28] sm:$0xff] %vm952, %v925
        %959 = vst.msk [vmem:[#allocation2 + $0x30] sm:$0xff] %vm952, %v926
        %960 = vst.msk [vmem:[#allocation2 + $0x38] sm:$0xff] %vm952, %v927
        %961 = vst.msk [vmem:[#allocation2 + $0x40] sm:$0xff] %vm952, %v928
        %962 = vst.msk [vmem:[#allocation2 + $0x48] sm:$0xff] %vm952, %v929
        %963 = vst.msk [vmem:[#allocation2 + $0x50] sm:$0xff] %vm952, %v930
        %964 = vst.msk [vmem:[#allocation2 + $0x58] sm:$0xff] %vm952, %v931
        %965 = vst.msk [vmem:[#allocation2 + $0x60] sm:$0xff] %vm952, %v932
        %966 = vst.msk [vmem:[#allocation2 + $0x68] sm:$0xff] %vm952, %v933
        %967 = vst.msk [vmem:[#allocation2 + $0x70] sm:$0xff] %vm952, %v934
        %968 = vst.msk [vmem:[#allocation2 + $0x78] sm:$0xff] %vm952, %v935
        %969 = vst.msk [vmem:[#allocation2 + $0x80] sm:$0xff] %vm952, %v936
        %970 = vst.msk [vmem:[#allocation2 + $0x88] sm:$0xff] %vm952, %v937
        %971 = vst.msk [vmem:[#allocation2 + $0x90] sm:$0xff] %vm952, %v938
        %972 = vst.msk [vmem:[#allocation2 + $0x98] sm:$0xff] %vm952, %v939
        %973 = vst.msk [vmem:[#allocation2 + $0xa0] sm:$0xff] %vm952, %v940
        %974 = vst.msk [vmem:[#allocation2 + $0xa8] sm:$0xff] %vm952, %v941
        %975 = vst.msk [vmem:[#allocation2 + $0xb0] sm:$0xff] %vm952, %v942
        %976 = vst.msk [vmem:[#allocation2 + $0xb8] sm:$0xff] %vm952, %v943
        %977 = vst.msk [vmem:[#allocation2 + $0xc0] sm:$0xff] %vm952, %v944
        %978 = vst.msk [vmem:[#allocation2 + $0xc8] sm:$0xff] %vm952, %v945
        %979 = vst.msk [vmem:[#allocation2 + $0xd0] sm:$0xff] %vm952, %v946
        %980 = vst.msk [vmem:[#allocation2 + $0xd8] sm:$0xff] %vm952, %v947
        %981 = vst.msk [vmem:[#allocation2 + $0xe0] sm:$0xff] %vm952, %v948
        %982 = vst.msk [vmem:[#allocation2 + $0xe8] sm:$0xff] %vm952, %v949
        %983 = vst.msk [vmem:[#allocation2 + $0xf0] sm:$0xff] %vm952, %v950
        %984 = vst.msk [vmem:[#allocation2 + $0xf8] sm:$0xff] %vm952, %v951
        %p985 = scmp.eq.s32.totalorder %s25, 1
        // Predicated region
        $region107: #{tpu_custom_call.1} parent=89 // pred_check
          %p986 = pneg %p985
        $region108: #{tpu_custom_call.1} parent=89 // pred_check_branch
          %988 = sbr.rel (%p986) target = $region110
        $region109: #{tpu_custom_call.1} parent=89 // pred_region
          %v989 = vld [vmem:[#allocation2] sm:$0xff]
          %v990 = vld [vmem:[#allocation2 + $0x8] sm:$0xff]
          %v991 = vld [vmem:[#allocation2 + $0x10] sm:$0xff]
          %v992 = vld [vmem:[#allocation2 + $0x18] sm:$0xff]
          %v993 = vld [vmem:[#allocation2 + $0x20] sm:$0xff]
          %v994 = vld [vmem:[#allocation2 + $0x28] sm:$0xff]
          %v995 = vld [vmem:[#allocation2 + $0x30] sm:$0xff]
          %v996 = vld [vmem:[#allocation2 + $0x38] sm:$0xff]
          %v997 = vld [vmem:[#allocation2 + $0x40] sm:$0xff]
          %v998 = vld [vmem:[#allocation2 + $0x48] sm:$0xff]
          %v999 = vld [vmem:[#allocation2 + $0x50] sm:$0xff]
          %v1000 = vld [vmem:[#allocation2 + $0x58] sm:$0xff]
          %v1001 = vld [vmem:[#allocation2 + $0x60] sm:$0xff]
          %v1002 = vld [vmem:[#allocation2 + $0x68] sm:$0xff]
          %v1003 = vld [vmem:[#allocation2 + $0x70] sm:$0xff]
          %v1004 = vld [vmem:[#allocation2 + $0x78] sm:$0xff]
          %v1005 = vld [vmem:[#allocation2 + $0x80] sm:$0xff]
          %v1006 = vld [vmem:[#allocation2 + $0x88] sm:$0xff]
          %v1007 = vld [vmem:[#allocation2 + $0x90] sm:$0xff]
          %v1008 = vld [vmem:[#allocation2 + $0x98] sm:$0xff]
          %v1009 = vld [vmem:[#allocation2 + $0xa0] sm:$0xff]
          %v1010 = vld [vmem:[#allocation2 + $0xa8] sm:$0xff]
          %v1011 = vld [vmem:[#allocation2 + $0xb0] sm:$0xff]
          %v1012 = vld [vmem:[#allocation2 + $0xb8] sm:$0xff]
          %v1013 = vld [vmem:[#allocation2 + $0xc0] sm:$0xff]
          %v1014 = vld [vmem:[#allocation2 + $0xc8] sm:$0xff]
          %v1015 = vld [vmem:[#allocation2 + $0xd0] sm:$0xff]
          %v1016 = vld [vmem:[#allocation2 + $0xd8] sm:$0xff]
          %v1017 = vld [vmem:[#allocation2 + $0xe0] sm:$0xff]
          %v1018 = vld [vmem:[#allocation2 + $0xe8] sm:$0xff]
          %v1019 = vld [vmem:[#allocation2 + $0xf0] sm:$0xff]
          %v1020 = vld [vmem:[#allocation2 + $0xf8] sm:$0xff]
          %v1021 = vld [vmem:[%s467] sm:$0xff]
          %v1022 = vld [vmem:[%s467 + $0x8] sm:$0xff]
          %v1023 = vld [vmem:[%s467 + $0x10] sm:$0xff]
          %v1024 = vld [vmem:[%s467 + $0x18] sm:$0xff]
          %v1025 = vld [vmem:[%s467 + $0x20] sm:$0xff]
          %v1026 = vld [vmem:[%s467 + $0x28] sm:$0xff]
          %v1027 = vld [vmem:[%s467 + $0x30] sm:$0xff]
          %v1028 = vld [vmem:[%s467 + $0x38] sm:$0xff]
          %v1029 = vld [vmem:[%s467 + $0x40] sm:$0xff]
          %v1030 = vld [vmem:[%s467 + $0x48] sm:$0xff]
          %v1031 = vld [vmem:[%s467 + $0x50] sm:$0xff]
          %v1032 = vld [vmem:[%s467 + $0x58] sm:$0xff]
          %v1033 = vld [vmem:[%s467 + $0x60] sm:$0xff]
          %v1034 = vld [vmem:[%s467 + $0x68] sm:$0xff]
          %v1035 = vld [vmem:[%s467 + $0x70] sm:$0xff]
          %v1036 = vld [vmem:[%s467 + $0x78] sm:$0xff]
          %v1037 = vld [vmem:[%s467 + $0x80] sm:$0xff]
          %v1038 = vld [vmem:[%s467 + $0x88] sm:$0xff]
          %v1039 = vld [vmem:[%s467 + $0x90] sm:$0xff]
          %v1040 = vld [vmem:[%s467 + $0x98] sm:$0xff]
          %v1041 = vld [vmem:[%s467 + $0xa0] sm:$0xff]
          %v1042 = vld [vmem:[%s467 + $0xa8] sm:$0xff]
          %v1043 = vld [vmem:[%s467 + $0xb0] sm:$0xff]
          %v1044 = vld [vmem:[%s467 + $0xb8] sm:$0xff]
          %v1045 = vld [vmem:[%s467 + $0xc0] sm:$0xff]
          %v1046 = vld [vmem:[%s467 + $0xc8] sm:$0xff]
          %v1047 = vld [vmem:[%s467 + $0xd0] sm:$0xff]
          %v1048 = vld [vmem:[%s467 + $0xd8] sm:$0xff]
          %v1049 = vld [vmem:[%s467 + $0xe0] sm:$0xff]
          %v1050 = vld [vmem:[%s467 + $0xe8] sm:$0xff]
          %v1051 = vld [vmem:[%s467 + $0xf0] sm:$0xff]
          %v1052 = vld [vmem:[%s467 + $0xf8] sm:$0xff]
          %1054 = vset.pattern.permute.xlu0 0
          %1055 = vperm.xlu0 %1054, %v1021
          %v1056 = vpop.permute.xlu0 %1055
          %1059 = vset.pattern.permute.xlu0 0
          %1060 = vperm.xlu0 %1059, %v1022
          %v1061 = vpop.permute.xlu0 %1060
          %1064 = vset.pattern.permute.xlu0 0
          %1065 = vperm.xlu0 %1064, %v1023
          %v1066 = vpop.permute.xlu0 %1065
          %1069 = vset.pattern.permute.xlu0 0
          %1070 = vperm.xlu0 %1069, %v1024
          %v1071 = vpop.permute.xlu0 %1070
          %1074 = vset.pattern.permute.xlu0 0
          %1075 = vperm.xlu0 %1074, %v1025
          %v1076 = vpop.permute.xlu0 %1075
          %1079 = vset.pattern.permute.xlu0 0
          %1080 = vperm.xlu0 %1079, %v1026
          %v1081 = vpop.permute.xlu0 %1080
          %1084 = vset.pattern.permute.xlu0 0
          %1085 = vperm.xlu0 %1084, %v1027
          %v1086 = vpop.permute.xlu0 %1085
          %1089 = vset.pattern.permute.xlu0 0
          %1090 = vperm.xlu0 %1089, %v1028
          %v1091 = vpop.permute.xlu0 %1090
          %1094 = vset.pattern.permute.xlu0 0
          %1095 = vperm.xlu0 %1094, %v1029
          %v1096 = vpop.permute.xlu0 %1095
          %1099 = vset.pattern.permute.xlu0 0
          %1100 = vperm.xlu0 %1099, %v1030
          %v1101 = vpop.permute.xlu0 %1100
          %1104 = vset.pattern.permute.xlu0 0
          %1105 = vperm.xlu0 %1104, %v1031
          %v1106 = vpop.permute.xlu0 %1105
          %1109 = vset.pattern.permute.xlu0 0
          %1110 = vperm.xlu0 %1109, %v1032
          %v1111 = vpop.permute.xlu0 %1110
          %1114 = vset.pattern.permute.xlu0 0
          %1115 = vperm.xlu0 %1114, %v1033
          %v1116 = vpop.permute.xlu0 %1115
          %1119 = vset.pattern.permute.xlu0 0
          %1120 = vperm.xlu0 %1119, %v1034
          %v1121 = vpop.permute.xlu0 %1120
          %1124 = vset.pattern.permute.xlu0 0
          %1125 = vperm.xlu0 %1124, %v1035
          %v1126 = vpop.permute.xlu0 %1125
          %1129 = vset.pattern.permute.xlu0 0
          %1130 = vperm.xlu0 %1129, %v1036
          %v1131 = vpop.permute.xlu0 %1130
          %1134 = vset.pattern.permute.xlu0 0
          %1135 = vperm.xlu0 %1134, %v1037
          %v1136 = vpop.permute.xlu0 %1135
          %1139 = vset.pattern.permute.xlu0 0
          %1140 = vperm.xlu0 %1139, %v1038
          %v1141 = vpop.permute.xlu0 %1140
          %1144 = vset.pattern.permute.xlu0 0
          %1145 = vperm.xlu0 %1144, %v1039
          %v1146 = vpop.permute.xlu0 %1145
          %1149 = vset.pattern.permute.xlu0 0
          %1150 = vperm.xlu0 %1149, %v1040
          %v1151 = vpop.permute.xlu0 %1150
          %1154 = vset.pattern.permute.xlu0 0
          %1155 = vperm.xlu0 %1154, %v1041
          %v1156 = vpop.permute.xlu0 %1155
          %1159 = vset.pattern.permute.xlu0 0
          %1160 = vperm.xlu0 %1159, %v1042
          %v1161 = vpop.permute.xlu0 %1160
          %1164 = vset.pattern.permute.xlu0 0
          %1165 = vperm.xlu0 %1164, %v1043
          %v1166 = vpop.permute.xlu0 %1165
          %1169 = vset.pattern.permute.xlu0 0
          %1170 = vperm.xlu0 %1169, %v1044
          %v1171 = vpop.permute.xlu0 %1170
          %1174 = vset.pattern.permute.xlu0 0
          %1175 = vperm.xlu0 %1174, %v1045
          %v1176 = vpop.permute.xlu0 %1175
          %1179 = vset.pattern.permute.xlu0 0
          %1180 = vperm.xlu0 %1179, %v1046
          %v1181 = vpop.permute.xlu0 %1180
          %1184 = vset.pattern.permute.xlu0 0
          %1185 = vperm.xlu0 %1184, %v1047
          %v1186 = vpop.permute.xlu0 %1185
          %1189 = vset.pattern.permute.xlu0 0
          %1190 = vperm.xlu0 %1189, %v1048
          %v1191 = vpop.permute.xlu0 %1190
          %1194 = vset.pattern.permute.xlu0 0
          %1195 = vperm.xlu0 %1194, %v1049
          %v1196 = vpop.permute.xlu0 %1195
          %1199 = vset.pattern.permute.xlu0 0
          %1200 = vperm.xlu0 %1199, %v1050
          %v1201 = vpop.permute.xlu0 %1200
          %1204 = vset.pattern.permute.xlu0 0
          %1205 = vperm.xlu0 %1204, %v1051
          %v1206 = vpop.permute.xlu0 %1205
          %1209 = vset.pattern.permute.xlu0 0
          %1210 = vperm.xlu0 %1209, %v1052
          %v1211 = vpop.permute.xlu0 %1210
          %v1213 = vmul.f32 %v989, %v1056
          %v1214 = vmul.f32 %v990, %v1061
          %v1215 = vmul.f32 %v991, %v1066
          %v1216 = vmul.f32 %v992, %v1071
          %v1217 = vmul.f32 %v993, %v1076
          %v1218 = vmul.f32 %v994, %v1081
          %v1219 = vmul.f32 %v995, %v1086
          %v1220 = vmul.f32 %v996, %v1091
          %v1221 = vmul.f32 %v997, %v1096
          %v1222 = vmul.f32 %v998, %v1101
          %v1223 = vmul.f32 %v999, %v1106
          %v1224 = vmul.f32 %v1000, %v1111
          %v1225 = vmul.f32 %v1001, %v1116
          %v1226 = vmul.f32 %v1002, %v1121
          %v1227 = vmul.f32 %v1003, %v1126
          %v1228 = vmul.f32 %v1004, %v1131
          %v1229 = vmul.f32 %v1005, %v1136
          %v1230 = vmul.f32 %v1006, %v1141
          %v1231 = vmul.f32 %v1007, %v1146
          %v1232 = vmul.f32 %v1008, %v1151
          %v1233 = vmul.f32 %v1009, %v1156
          %v1234 = vmul.f32 %v1010, %v1161
          %v1235 = vmul.f32 %v1011, %v1166
          %v1236 = vmul.f32 %v1012, %v1171
          %v1237 = vmul.f32 %v1013, %v1176
          %v1238 = vmul.f32 %v1014, %v1181
          %v1239 = vmul.f32 %v1015, %v1186
          %v1240 = vmul.f32 %v1016, %v1191
          %v1241 = vmul.f32 %v1017, %v1196
          %v1242 = vmul.f32 %v1018, %v1201
          %v1243 = vmul.f32 %v1019, %v1206
          %v1244 = vmul.f32 %v1020, %v1211
          %v1245 = vpack.c.bf16 %v1214, %v1213
          %v1246 = vpack.c.bf16 %v1216, %v1215
          %v1247 = vpack.c.bf16 %v1218, %v1217
          %v1248 = vpack.c.bf16 %v1220, %v1219
          %v1249 = vpack.c.bf16 %v1222, %v1221
          %v1250 = vpack.c.bf16 %v1224, %v1223
          %v1251 = vpack.c.bf16 %v1226, %v1225
          %v1252 = vpack.c.bf16 %v1228, %v1227
          %v1253 = vpack.c.bf16 %v1230, %v1229
          %v1254 = vpack.c.bf16 %v1232, %v1231
          %v1255 = vpack.c.bf16 %v1234, %v1233
          %v1256 = vpack.c.bf16 %v1236, %v1235
          %v1257 = vpack.c.bf16 %v1238, %v1237
          %v1258 = vpack.c.bf16 %v1240, %v1239
          %v1259 = vpack.c.bf16 %v1242, %v1241
          %v1260 = vpack.c.bf16 %v1244, %v1243
          %v1261 = vld [vmem:[%s3] sm:$0xf]
          %v1262 = vld [vmem:[%s3 + $0x4] sm:$0xf]
          %v1263 = vld [vmem:[%s3 + $0x8] sm:$0xf]
          %v1264 = vld [vmem:[%s3 + $0xc] sm:$0xf]
          %v1269 = vunpack.c.l.b16 %v1261
          %v1270 = vunpack.c.l.b16 %v1262
          %v1271 = vunpack.c.l.b16 %v1263
          %v1272 = vunpack.c.l.b16 %v1264
          %v1273 = vpack.c.b16 %v1270, %v1269
          %v1274 = vpack.c.b16 %v1272, %v1271
          %v1278 = vsel %vm952, %v1245, 0
          %v1281 = vsel %vm952, %v1246, 0
          %v1284 = vsel %vm952, %v1247, 0
          %v1287 = vsel %vm952, %v1248, 0
          %v1290 = vsel %vm952, %v1249, 0
          %v1293 = vsel %vm952, %v1250, 0
          %v1296 = vsel %vm952, %v1251, 0
          %v1299 = vsel %vm952, %v1252, 0
          %v1302 = vsel %vm952, %v1253, 0
          %v1305 = vsel %vm952, %v1254, 0
          %v1308 = vsel %vm952, %v1255, 0
          %v1311 = vsel %vm952, %v1256, 0
          %v1314 = vsel %vm952, %v1257, 0
          %v1317 = vsel %vm952, %v1258, 0
          %v1320 = vsel %vm952, %v1259, 0
          %v1323 = vsel %vm952, %v1260, 0
          %1325 = vmatprep.subr.bf16.mxu0 0
          %1326 = vmatpush1.bf16.msra.mxu0 %v1273
          %1327 = vmatprep.subr.bf16.mxu0 0
          %1328 = vmatpush1.bf16.msra.mxu0 %v1274
          %1329 = vmatprep.subr.bf16.mxu0 0
          %1330 = vmatpush1.bf16.msra.mxu0 0
          %1331 = vmatprep.subr.bf16.mxu0 0
          %1332 = vmatpush1.bf16.msra.mxu0 0
          %1333 = vmatprep.subr.bf16.mxu0 0
          %1334 = vmatpush1.bf16.msra.mxu0 0
          %1335 = vmatprep.subr.bf16.mxu0 0
          %1336 = vmatpush1.bf16.msra.mxu0 0
          %1337 = vmatprep.subr.bf16.mxu0 0
          %1338 = vmatpush1.bf16.msra.mxu0 0
          %1339 = vmatprep.subr.bf16.mxu0 0
          %1340 = vmatpush1.bf16.msra.mxu0 0
          %1341 = vmatprep.subr.bf16.mxu0 0
          %1342 = vmatpush1.bf16.msra.mxu0 0
          %1343 = vmatprep.subr.bf16.mxu0 0
          %1344 = vmatpush1.bf16.msra.mxu0 0
          %1345 = vmatprep.subr.bf16.mxu0 0
          %1346 = vmatpush1.bf16.msra.mxu0 0
          %1347 = vmatprep.subr.bf16.mxu0 0
          %1348 = vmatpush1.bf16.msra.mxu0 0
          %1349 = vmatprep.subr.bf16.mxu0 0
          %1350 = vmatpush1.bf16.msra.mxu0 0
          %1351 = vmatprep.subr.bf16.mxu0 0
          %1352 = vmatpush1.bf16.msra.mxu0 0
          %1353 = vmatprep.subr.bf16.mxu0 0
          %1354 = vmatpush1.bf16.msra.mxu0 0
          %1355 = vmatprep.subr.bf16.mxu0 0
          %1356 = vmatpush1.bf16.msra.mxu0 0
          %1357 = vmatprep.mubr.bf16.mxu0 0
          %1358 = vmatmul.mubr.bf16.gmra.mrb[0].mxu0 %v1278
          %v1359 = vpop.f32.mrb[0].mxu0
          %v1360 = vadd.f32 0.0, %v1359
          %v1361 = vpop.f32.mrb[0].mxu0
          %v1362 = vpop.f32.mrb[0].mxu0
          %v1363 = vadd.f32 0.0, %v1362
          %v1364 = vpop.f32.mrb[0].mxu0
          %1365 = vmatprep.mubr.bf16.mxu0 0
          %1366 = vmatmul.mubr.bf16.gmra.mrb[0].mxu0 %v1281
          %v1367 = vpop.f32.mrb[0].mxu0
          %v1368 = vadd.f32 0.0, %v1367
          %v1369 = vpop.f32.mrb[0].mxu0
          %v1370 = vpop.f32.mrb[0].mxu0
          %v1371 = vadd.f32 0.0, %v1370
          %v1372 = vpop.f32.mrb[0].mxu0
          %1373 = vmatprep.mubr.bf16.mxu0 0
          %1374 = vmatmul.mubr.bf16.gmra.mrb[0].mxu0 %v1284
          %v1375 = vpop.f32.mrb[0].mxu0
          %v1376 = vadd.f32 0.0, %v1375
          %v1377 = vpop.f32.mrb[0].mxu0
          %v1378 = vpop.f32.mrb[0].mxu0
          %v1379 = vadd.f32 0.0, %v1378
          %v1380 = vpop.f32.mrb[0].mxu0
          %1381 = vmatprep.mubr.bf16.mxu0 0
          %1382 = vmatmul.mubr.bf16.gmra.mrb[0].mxu0 %v1287
          %v1383 = vpop.f32.mrb[0].mxu0
          %v1384 = vadd.f32 0.0, %v1383
          %v1385 = vpop.f32.mrb[0].mxu0
          %v1386 = vpop.f32.mrb[0].mxu0
          %v1387 = vadd.f32 0.0, %v1386
          %v1388 = vpop.f32.mrb[0].mxu0
          %1389 = vmatprep.mubr.bf16.mxu0 0
          %1390 = vmatmul.mubr.bf16.gmra.mrb[0].mxu0 %v1290
          %v1391 = vpop.f32.mrb[0].mxu0
          %v1392 = vadd.f32 0.0, %v1391
          %v1393 = vpop.f32.mrb[0].mxu0
          %v1394 = vpop.f32.mrb[0].mxu0
          %v1395 = vadd.f32 0.0, %v1394
          %v1396 = vpop.f32.mrb[0].mxu0
          %1397 = vmatprep.mubr.bf16.mxu0 0
          %1398 = vmatmul.mubr.bf16.gmra.mrb[0].mxu0 %v1293
          %v1399 = vpop.f32.mrb[0].mxu0
          %v1400 = vadd.f32 0.0, %v1399
          %v1401 = vpop.f32.mrb[0].mxu0
          %v1402 = vpop.f32.mrb[0].mxu0
          %v1403 = vadd.f32 0.0, %v1402
          %v1404 = vpop.f32.mrb[0].mxu0
          %1405 = vmatprep.mubr.bf16.mxu0 0
          %1406 = vmatmul.mubr.bf16.gmra.mrb[0].mxu0 %v1296
          %v1407 = vpop.f32.mrb[0].mxu0
          %v1408 = vadd.f32 0.0, %v1407
          %v1409 = vpop.f32.mrb[0].mxu0
          %v1410 = vpop.f32.mrb[0].mxu0
          %v1411 = vadd.f32 0.0, %v1410
          %v1412 = vpop.f32.mrb[0].mxu0
          %1413 = vmatprep.mubr.bf16.mxu0 0
          %1414 = vmatmul.mubr.bf16.gmra.mrb[0].mxu0 %v1299
          %v1415 = vpop.f32.mrb[0].mxu0
          %v1416 = vadd.f32 0.0, %v1415
          %v1417 = vpop.f32.mrb[0].mxu0
          %v1418 = vpop.f32.mrb[0].mxu0
          %v1419 = vadd.f32 0.0, %v1418
          %v1420 = vpop.f32.mrb[0].mxu0
          %1421 = vmatprep.mubr.bf16.mxu0 0
          %1422 = vmatmul.mubr.bf16.gmra.mrb[0].mxu0 %v1302
          %v1423 = vpop.f32.mrb[0].mxu0
          %v1424 = vadd.f32 0.0, %v1423
          %v1425 = vpop.f32.mrb[0].mxu0
          %v1426 = vpop.f32.mrb[0].mxu0
          %v1427 = vadd.f32 0.0, %v1426
          %v1428 = vpop.f32.mrb[0].mxu0
          %1429 = vmatprep.mubr.bf16.mxu0 0
          %1430 = vmatmul.mubr.bf16.gmra.mrb[0].mxu0 %v1305
          %v1431 = vpop.f32.mrb[0].mxu0
          %v1432 = vadd.f32 0.0, %v1431
          %v1433 = vpop.f32.mrb[0].mxu0
          %v1434 = vpop.f32.mrb[0].mxu0
          %v1435 = vadd.f32 0.0, %v1434
          %v1436 = vpop.f32.mrb[0].mxu0
          %1437 = vmatprep.mubr.bf16.mxu0 0
          %1438 = vmatmul.mubr.bf16.gmra.mrb[0].mxu0 %v1308
          %v1439 = vpop.f32.mrb[0].mxu0
          %v1440 = vadd.f32 0.0, %v1439
          %v1441 = vpop.f32.mrb[0].mxu0
          %v1442 = vpop.f32.mrb[0].mxu0
          %v1443 = vadd.f32 0.0, %v1442
          %v1444 = vpop.f32.mrb[0].mxu0
          %1445 = vmatprep.mubr.bf16.mxu0 0
          %1446 = vmatmul.mubr.bf16.gmra.mrb[0].mxu0 %v1311
          %v1447 = vpop.f32.mrb[0].mxu0
          %v1448 = vadd.f32 0.0, %v1447
          %v1449 = vpop.f32.mrb[0].mxu0
          %v1450 = vpop.f32.mrb[0].mxu0
          %v1451 = vadd.f32 0.0, %v1450
          %v1452 = vpop.f32.mrb[0].mxu0
          %1453 = vmatprep.mubr.bf16.mxu0 0
          %1454 = vmatmul.mubr.bf16.gmra.mrb[0].mxu0 %v1314
          %v1455 = vpop.f32.mrb[0].mxu0
          %v1456 = vadd.f32 0.0, %v1455
          %v1457 = vpop.f32.mrb[0].mxu0
          %v1458 = vpop.f32.mrb[0].mxu0
          %v1459 = vadd.f32 0.0, %v1458
          %v1460 = vpop.f32.mrb[0].mxu0
          %1461 = vmatprep.mubr.bf16.mxu0 0
          %1462 = vmatmul.mubr.bf16.gmra.mrb[0].mxu0 %v1317
          %v1463 = vpop.f32.mrb[0].mxu0
          %v1464 = vadd.f32 0.0, %v1463
          %v1465 = vpop.f32.mrb[0].mxu0
          %v1466 = vpop.f32.mrb[0].mxu0
          %v1467 = vadd.f32 0.0, %v1466
          %v1468 = vpop.f32.mrb[0].mxu0
          %1469 = vmatprep.mubr.bf16.mxu0 0
          %1470 = vmatmul.mubr.bf16.gmra.mrb[0].mxu0 %v1320
          %v1471 = vpop.f32.mrb[0].mxu0
          %v1472 = vadd.f32 0.0, %v1471
          %v1473 = vpop.f32.mrb[0].mxu0
          %v1474 = vpop.f32.mrb[0].mxu0
          %v1475 = vadd.f32 0.0, %v1474
          %v1476 = vpop.f32.mrb[0].mxu0
          %1477 = vmatprep.mubr.bf16.mxu0 0
          %1478 = vmatmul.mubr.bf16.gmra.mrb[0].mxu0 %v1323
          %v1479 = vpop.f32.mrb[0].mxu0
          %v1480 = vadd.f32 0.0, %v1479
          %v1481 = vpop.f32.mrb[0].mxu0
          %v1482 = vpop.f32.mrb[0].mxu0
          %v1483 = vadd.f32 0.0, %v1482
          %v1484 = vpop.f32.mrb[0].mxu0
          %1485 = vdwg.mxu0
          %v1486 = vmax.f32 %v1360, 0.0
          %v1487 = vmax.f32 %v1363, 0.0
          %v1488 = vmax.f32 %v1368, 0.0
          %v1489 = vmax.f32 %v1371, 0.0
          %v1490 = vmax.f32 %v1376, 0.0
          %v1491 = vmax.f32 %v1379, 0.0
          %v1492 = vmax.f32 %v1384, 0.0
          %v1493 = vmax.f32 %v1387, 0.0
          %v1494 = vmax.f32 %v1392, 0.0
          %v1495 = vmax.f32 %v1395, 0.0
          %v1496 = vmax.f32 %v1400, 0.0
          %v1497 = vmax.f32 %v1403, 0.0
          %v1498 = vmax.f32 %v1408, 0.0
          %v1499 = vmax.f32 %v1411, 0.0
          %v1500 = vmax.f32 %v1416, 0.0
          %v1501 = vmax.f32 %v1419, 0.0
          %v1502 = vmax.f32 %v1424, 0.0
          %v1503 = vmax.f32 %v1427, 0.0
          %v1504 = vmax.f32 %v1432, 0.0
          %v1505 = vmax.f32 %v1435, 0.0
          %v1506 = vmax.f32 %v1440, 0.0
          %v1507 = vmax.f32 %v1443, 0.0
          %v1508 = vmax.f32 %v1448, 0.0
          %v1509 = vmax.f32 %v1451, 0.0
          %v1510 = vmax.f32 %v1456, 0.0
          %v1511 = vmax.f32 %v1459, 0.0
          %v1512 = vmax.f32 %v1464, 0.0
          %v1513 = vmax.f32 %v1467, 0.0
          %v1514 = vmax.f32 %v1472, 0.0
          %v1515 = vmax.f32 %v1475, 0.0
          %v1516 = vmax.f32 %v1480, 0.0
          %v1517 = vmax.f32 %v1483, 0.0
          %v1518 = vld [vmem:[#allocation3] sm:$0xff]
          %v1519 = vld [vmem:[#allocation3 + $0x8] sm:$0xff]
          %v1520 = vld [vmem:[#allocation3 + $0x10] sm:$0xff]
          %v1521 = vld [vmem:[#allocation3 + $0x18] sm:$0xff]
          %v1522 = vld [vmem:[#allocation3 + $0x20] sm:$0xff]
          %v1523 = vld [vmem:[#allocation3 + $0x28] sm:$0xff]
          %v1524 = vld [vmem:[#allocation3 + $0x30] sm:$0xff]
          %v1525 = vld [vmem:[#allocation3 + $0x38] sm:$0xff]
          %v1526 = vld [vmem:[#allocation3 + $0x40] sm:$0xff]
          %v1527 = vld [vmem:[#allocation3 + $0x48] sm:$0xff]
          %v1528 = vld [vmem:[#allocation3 + $0x50] sm:$0xff]
          %v1529 = vld [vmem:[#allocation3 + $0x58] sm:$0xff]
          %v1530 = vld [vmem:[#allocation3 + $0x60] sm:$0xff]
          %v1531 = vld [vmem:[#allocation3 + $0x68] sm:$0xff]
          %v1532 = vld [vmem:[#allocation3 + $0x70] sm:$0xff]
          %v1533 = vld [vmem:[#allocation3 + $0x78] sm:$0xff]
          %v1534 = vld [vmem:[#allocation3 + $0x80] sm:$0xff]
          %v1535 = vld [vmem:[#allocation3 + $0x88] sm:$0xff]
          %v1536 = vld [vmem:[#allocation3 + $0x90] sm:$0xff]
          %v1537 = vld [vmem:[#allocation3 + $0x98] sm:$0xff]
          %v1538 = vld [vmem:[#allocation3 + $0xa0] sm:$0xff]
          %v1539 = vld [vmem:[#allocation3 + $0xa8] sm:$0xff]
          %v1540 = vld [vmem:[#allocation3 + $0xb0] sm:$0xff]
          %v1541 = vld [vmem:[#allocation3 + $0xb8] sm:$0xff]
          %v1542 = vld [vmem:[#allocation3 + $0xc0] sm:$0xff]
          %v1543 = vld [vmem:[#allocation3 + $0xc8] sm:$0xff]
          %v1544 = vld [vmem:[#allocation3 + $0xd0] sm:$0xff]
          %v1545 = vld [vmem:[#allocation3 + $0xd8] sm:$0xff]
          %v1546 = vld [vmem:[#allocation3 + $0xe0] sm:$0xff]
          %v1547 = vld [vmem:[#allocation3 + $0xe8] sm:$0xff]
          %v1548 = vld [vmem:[#allocation3 + $0xf0] sm:$0xff]
          %v1549 = vld [vmem:[#allocation3 + $0xf8] sm:$0xff]
          %v1550 = vld [vmem:[%s421] sm:$0xff]
          %v1551 = vld [vmem:[%s421 + $0x8] sm:$0xff]
          %v1552 = vld [vmem:[%s421 + $0x10] sm:$0xff]
          %v1553 = vld [vmem:[%s421 + $0x18] sm:$0xff]
          %v1554 = vld [vmem:[%s421 + $0x20] sm:$0xff]
          %v1555 = vld [vmem:[%s421 + $0x28] sm:$0xff]
          %v1556 = vld [vmem:[%s421 + $0x30] sm:$0xff]
          %v1557 = vld [vmem:[%s421 + $0x38] sm:$0xff]
          %v1558 = vld [vmem:[%s421 + $0x40] sm:$0xff]
          %v1559 = vld [vmem:[%s421 + $0x48] sm:$0xff]
          %v1560 = vld [vmem:[%s421 + $0x50] sm:$0xff]
          %v1561 = vld [vmem:[%s421 + $0x58] sm:$0xff]
          %v1562 = vld [vmem:[%s421 + $0x60] sm:$0xff]
          %v1563 = vld [vmem:[%s421 + $0x68] sm:$0xff]
          %v1564 = vld [vmem:[%s421 + $0x70] sm:$0xff]
          %v1565 = vld [vmem:[%s421 + $0x78] sm:$0xff]
          %v1566 = vunpack.c.l.s8.bf16 %v1550
          %v1567 = vunpack.c.l.s8.bf16 %v1551
          %v1568 = vunpack.c.h.s8.bf16 %v1550
          %v1569 = vunpack.c.h.s8.bf16 %v1551
          %v1570 = vunpack.c.l.s8.bf16 %v1552
          %v1571 = vunpack.c.l.s8.bf16 %v1553
          %v1572 = vunpack.c.h.s8.bf16 %v1552
          %v1573 = vunpack.c.h.s8.bf16 %v1553
          %v1574 = vunpack.c.l.s8.bf16 %v1554
          %v1575 = vunpack.c.l.s8.bf16 %v1555
          %v1576 = vunpack.c.h.s8.bf16 %v1554
          %v1577 = vunpack.c.h.s8.bf16 %v1555
          %v1578 = vunpack.c.l.s8.bf16 %v1556
          %v1579 = vunpack.c.l.s8.bf16 %v1557
          %v1580 = vunpack.c.h.s8.bf16 %v1556
          %v1581 = vunpack.c.h.s8.bf16 %v1557
          %v1582 = vunpack.c.l.s8.bf16 %v1558
          %v1583 = vunpack.c.l.s8.bf16 %v1559
          %v1584 = vunpack.c.h.s8.bf16 %v1558
          %v1585 = vunpack.c.h.s8.bf16 %v1559
          %v1586 = vunpack.c.l.s8.bf16 %v1560
          %v1587 = vunpack.c.l.s8.bf16 %v1561
          %v1588 = vunpack.c.h.s8.bf16 %v1560
          %v1589 = vunpack.c.h.s8.bf16 %v1561
          %v1590 = vunpack.c.l.s8.bf16 %v1562
          %v1591 = vunpack.c.l.s8.bf16 %v1563
          %v1592 = vunpack.c.h.s8.bf16 %v1562
          %v1593 = vunpack.c.h.s8.bf16 %v1563
          %v1594 = vunpack.c.l.s8.bf16 %v1564
          %v1595 = vunpack.c.l.s8.bf16 %v1565
          %v1596 = vunpack.c.h.s8.bf16 %v1564
          %v1597 = vunpack.c.h.s8.bf16 %v1565
          %v1598 = vpack.c.bf16 %v1487, %v1486
          %v1599 = vpack.c.bf16 %v1489, %v1488
          %v1600 = vpack.c.bf16 %v1491, %v1490
          %v1601 = vpack.c.bf16 %v1493, %v1492
          %v1602 = vpack.c.bf16 %v1495, %v1494
          %v1603 = vpack.c.bf16 %v1497, %v1496
          %v1604 = vpack.c.bf16 %v1499, %v1498
          %v1605 = vpack.c.bf16 %v1501, %v1500
          %v1606 = vpack.c.bf16 %v1503, %v1502
          %v1607 = vpack.c.bf16 %v1505, %v1504
          %v1608 = vpack.c.bf16 %v1507, %v1506
          %v1609 = vpack.c.bf16 %v1509, %v1508
          %v1610 = vpack.c.bf16 %v1511, %v1510
          %v1611 = vpack.c.bf16 %v1513, %v1512
          %v1612 = vpack.c.bf16 %v1515, %v1514
          %v1613 = vpack.c.bf16 %v1517, %v1516
          %1614 = vmatprep.subr.bf16.mxu0 0
          %1615 = vmatpush1.bf16.msra.mxu0 %v1598
          %1616 = vmatprep.subr.bf16.mxu0 0
          %1617 = vmatpush1.bf16.msra.mxu0 %v1599
          %1618 = vmatprep.subr.bf16.mxu0 0
          %1619 = vmatpush1.bf16.msra.mxu0 %v1600
          %1620 = vmatprep.subr.bf16.mxu0 0
          %1621 = vmatpush1.bf16.msra.mxu0 %v1601
          %1622 = vmatprep.subr.bf16.mxu0 0
          %1623 = vmatpush1.bf16.msra.mxu0 %v1602
          %1624 = vmatprep.subr.bf16.mxu0 0
          %1625 = vmatpush1.bf16.msra.mxu0 %v1603
          %1626 = vmatprep.subr.bf16.mxu0 0
          %1627 = vmatpush1.bf16.msra.mxu0 %v1604
          %1628 = vmatprep.subr.bf16.mxu0 0
          %1629 = vmatpush1.bf16.msra.mxu0 %v1605
          %1630 = vmatprep.subr.bf16.mxu0 0
          %1631 = vmatpush1.bf16.msra.mxu0 %v1606
          %1632 = vmatprep.subr.bf16.mxu0 0
          %1633 = vmatpush1.bf16.msra.mxu0 %v1607
          %1634 = vmatprep.subr.bf16.mxu0 0
          %1635 = vmatpush1.bf16.msra.mxu0 %v1608
          %1636 = vmatprep.subr.bf16.mxu0 0
          %1637 = vmatpush1.bf16.msra.mxu0 %v1609
          %1638 = vmatprep.subr.bf16.mxu0 0
          %1639 = vmatpush1.bf16.msra.mxu0 %v1610
          %1640 = vmatprep.subr.bf16.mxu0 0
          %1641 = vmatpush1.bf16.msra.mxu0 %v1611
          %1642 = vmatprep.subr.bf16.mxu0 0
          %1643 = vmatpush1.bf16.msra.mxu0 %v1612
          %1644 = vmatprep.subr.bf16.mxu0 0
          %1645 = vmatpush1.bf16.msra.mxu0 %v1613
          %1646 = vmatprep.mubr.bf16.mxu0 %v1567
          %1647 = vmatmul.mubr.bf16.gmra.mrb[0].mxu0 %v1566
          %v1648 = vpop.f32.mrb[0].mxu0
          %v1649 = vadd.f32 0.0, %v1648
          %v1650 = vpop.f32.mrb[0].mxu0
          %v1651 = vpop.f32.mrb[0].mxu0
          %v1652 = vadd.f32 0.0, %v1651
          %v1653 = vpop.f32.mrb[0].mxu0
          %1654 = vmatprep.mubr.bf16.mxu0 %v1569
          %1655 = vmatmul.mubr.bf16.gmra.mrb[0].mxu0 %v1568
          %v1656 = vpop.f32.mrb[0].mxu0
          %v1657 = vadd.f32 0.0, %v1656
          %v1658 = vpop.f32.mrb[0].mxu0
          %v1659 = vpop.f32.mrb[0].mxu0
          %v1660 = vadd.f32 0.0, %v1659
          %v1661 = vpop.f32.mrb[0].mxu0
          %1662 = vmatprep.mubr.bf16.mxu0 %v1571
          %1663 = vmatmul.mubr.bf16.gmra.mrb[0].mxu0 %v1570
          %v1664 = vpop.f32.mrb[0].mxu0
          %v1665 = vadd.f32 0.0, %v1664
          %v1666 = vpop.f32.mrb[0].mxu0
          %v1667 = vpop.f32.mrb[0].mxu0
          %v1668 = vadd.f32 0.0, %v1667
          %v1669 = vpop.f32.mrb[0].mxu0
          %1670 = vmatprep.mubr.bf16.mxu0 %v1573
          %1671 = vmatmul.mubr.bf16.gmra.mrb[0].mxu0 %v1572
          %v1672 = vpop.f32.mrb[0].mxu0
          %v1673 = vadd.f32 0.0, %v1672
          %v1674 = vpop.f32.mrb[0].mxu0
          %v1675 = vpop.f32.mrb[0].mxu0
          %v1676 = vadd.f32 0.0, %v1675
          %v1677 = vpop.f32.mrb[0].mxu0
          %1678 = vmatprep.mubr.bf16.mxu0 %v1575
          %1679 = vmatmul.mubr.bf16.gmra.mrb[0].mxu0 %v1574
          %v1680 = vpop.f32.mrb[0].mxu0
          %v1681 = vadd.f32 0.0, %v1680
          %v1682 = vpop.f32.mrb[0].mxu0
          %v1683 = vpop.f32.mrb[0].mxu0
          %v1684 = vadd.f32 0.0, %v1683
          %v1685 = vpop.f32.mrb[0].mxu0
          %1686 = vmatprep.mubr.bf16.mxu0 %v1577
          %1687 = vmatmul.mubr.bf16.gmra.mrb[0].mxu0 %v1576
          %v1688 = vpop.f32.mrb[0].mxu0
          %v1689 = vadd.f32 0.0, %v1688
          %v1690 = vpop.f32.mrb[0].mxu0
          %v1691 = vpop.f32.mrb[0].mxu0
          %v1692 = vadd.f32 0.0, %v1691
          %v1693 = vpop.f32.mrb[0].mxu0
          %1694 = vmatprep.mubr.bf16.mxu0 %v1579
          %1695 = vmatmul.mubr.bf16.gmra.mrb[0].mxu0 %v1578
          %v1696 = vpop.f32.mrb[0].mxu0
          %v1697 = vadd.f32 0.0, %v1696
          %v1698 = vpop.f32.mrb[0].mxu0
          %v1699 = vpop.f32.mrb[0].mxu0
          %v1700 = vadd.f32 0.0, %v1699
          %v1701 = vpop.f32.mrb[0].mxu0
          %1702 = vmatprep.mubr.bf16.mxu0 %v1581
          %1703 = vmatmul.mubr.bf16.gmra.mrb[0].mxu0 %v1580
          %v1704 = vpop.f32.mrb[0].mxu0
          %v1705 = vadd.f32 0.0, %v1704
          %v1706 = vpop.f32.mrb[0].mxu0
          %v1707 = vpop.f32.mrb[0].mxu0
          %v1708 = vadd.f32 0.0, %v1707
          %v1709 = vpop.f32.mrb[0].mxu0
          %1710 = vmatprep.mubr.bf16.mxu0 %v1583
          %1711 = vmatmul.mubr.bf16.gmra.mrb[0].mxu0 %v1582
          %v1712 = vpop.f32.mrb[0].mxu0
          %v1713 = vadd.f32 0.0, %v1712
          %v1714 = vpop.f32.mrb[0].mxu0
          %v1715 = vpop.f32.mrb[0].mxu0
          %v1716 = vadd.f32 0.0, %v1715
          %v1717 = vpop.f32.mrb[0].mxu0
          %1718 = vmatprep.mubr.bf16.mxu0 %v1585
          %1719 = vmatmul.mubr.bf16.gmra.mrb[0].mxu0 %v1584
          %v1720 = vpop.f32.mrb[0].mxu0
          %v1721 = vadd.f32 0.0, %v1720
          %v1722 = vpop.f32.mrb[0].mxu0
          %v1723 = vpop.f32.mrb[0].mxu0
          %v1724 = vadd.f32 0.0, %v1723
          %v1725 = vpop.f32.mrb[0].mxu0
          %1726 = vmatprep.mubr.bf16.mxu0 %v1587
          %1727 = vmatmul.mubr.bf16.gmra.mrb[0].mxu0 %v1586
          %v1728 = vpop.f32.mrb[0].mxu0
          %v1729 = vadd.f32 0.0, %v1728
          %v1730 = vpop.f32.mrb[0].mxu0
          %v1731 = vpop.f32.mrb[0].mxu0
          %v1732 = vadd.f32 0.0, %v1731
          %v1733 = vpop.f32.mrb[0].mxu0
          %1734 = vmatprep.mubr.bf16.mxu0 %v1589
          %1735 = vmatmul.mubr.bf16.gmra.mrb[0].mxu0 %v1588
          %v1736 = vpop.f32.mrb[0].mxu0
          %v1737 = vadd.f32 0.0, %v1736
          %v1738 = vpop.f32.mrb[0].mxu0
          %v1739 = vpop.f32.mrb[0].mxu0
          %v1740 = vadd.f32 0.0, %v1739
          %v1741 = vpop.f32.mrb[0].mxu0
          %1742 = vmatprep.mubr.bf16.mxu0 %v1591
          %1743 = vmatmul.mubr.bf16.gmra.mrb[0].mxu0 %v1590
          %v1744 = vpop.f32.mrb[0].mxu0
          %v1745 = vadd.f32 0.0, %v1744
          %v1746 = vpop.f32.mrb[0].mxu0
          %v1747 = vpop.f32.mrb[0].mxu0
          %v1748 = vadd.f32 0.0, %v1747
          %v1749 = vpop.f32.mrb[0].mxu0
          %1750 = vmatprep.mubr.bf16.mxu0 %v1593
          %1751 = vmatmul.mubr.bf16.gmra.mrb[0].mxu0 %v1592
          %v1752 = vpop.f32.mrb[0].mxu0
          %v1753 = vadd.f32 0.0, %v1752
          %v1754 = vpop.f32.mrb[0].mxu0
          %v1755 = vpop.f32.mrb[0].mxu0
          %v1756 = vadd.f32 0.0, %v1755
          %v1757 = vpop.f32.mrb[0].mxu0
          %1758 = vmatprep.mubr.bf16.mxu0 %v1595
          %1759 = vmatmul.mubr.bf16.gmra.mrb[0].mxu0 %v1594
          %v1760 = vpop.f32.mrb[0].mxu0
          %v1761 = vadd.f32 0.0, %v1760
          %v1762 = vpop.f32.mrb[0].mxu0
          %v1763 = vpop.f32.mrb[0].mxu0
          %v1764 = vadd.f32 0.0, %v1763
          %v1765 = vpop.f32.mrb[0].mxu0
          %1766 = vmatprep.mubr.bf16.mxu0 %v1597
          %1767 = vmatmul.mubr.bf16.gmra.mrb[0].mxu0 %v1596
          %v1768 = vpop.f32.mrb[0].mxu0
          %v1769 = vadd.f32 0.0, %v1768
          %v1770 = vpop.f32.mrb[0].mxu0
          %v1771 = vpop.f32.mrb[0].mxu0
          %v1772 = vadd.f32 0.0, %v1771
          %v1773 = vpop.f32.mrb[0].mxu0
          %1774 = vdwg.mxu0
          %v1775 = vadd.f32 %v1518, %v1649
          %v1776 = vadd.f32 %v1519, %v1652
          %v1777 = vadd.f32 %v1520, %v1657
          %v1778 = vadd.f32 %v1521, %v1660
          %v1779 = vadd.f32 %v1522, %v1665
          %v1780 = vadd.f32 %v1523, %v1668
          %v1781 = vadd.f32 %v1524, %v1673
          %v1782 = vadd.f32 %v1525, %v1676
          %v1783 = vadd.f32 %v1526, %v1681
          %v1784 = vadd.f32 %v1527, %v1684
          %v1785 = vadd.f32 %v1528, %v1689
          %v1786 = vadd.f32 %v1529, %v1692
          %v1787 = vadd.f32 %v1530, %v1697
          %v1788 = vadd.f32 %v1531, %v1700
          %v1789 = vadd.f32 %v1532, %v1705
          %v1790 = vadd.f32 %v1533, %v1708
          %v1791 = vadd.f32 %v1534, %v1713
          %v1792 = vadd.f32 %v1535, %v1716
          %v1793 = vadd.f32 %v1536, %v1721
          %v1794 = vadd.f32 %v1537, %v1724
          %v1795 = vadd.f32 %v1538, %v1729
          %v1796 = vadd.f32 %v1539, %v1732
          %v1797 = vadd.f32 %v1540, %v1737
          %v1798 = vadd.f32 %v1541, %v1740
          %v1799 = vadd.f32 %v1542, %v1745
          %v1800 = vadd.f32 %v1543, %v1748
          %v1801 = vadd.f32 %v1544, %v1753
          %v1802 = vadd.f32 %v1545, %v1756
          %v1803 = vadd.f32 %v1546, %v1761
          %v1804 = vadd.f32 %v1547, %v1764
          %v1805 = vadd.f32 %v1548, %v1769
          %v1806 = vadd.f32 %v1549, %v1772
          %1807 = vst [vmem:[#allocation3] sm:$0xff] %v1775
          %1808 = vst [vmem:[#allocation3 + $0x8] sm:$0xff] %v1776
          %1809 = vst [vmem:[#allocation3 + $0x10] sm:$0xff] %v1777
          %1810 = vst [vmem:[#allocation3 + $0x18] sm:$0xff] %v1778
          %1811 = vst [vmem:[#allocation3 + $0x20] sm:$0xff] %v1779
          %1812 = vst [vmem:[#allocation3 + $0x28] sm:$0xff] %v1780
          %1813 = vst [vmem:[#allocation3 + $0x30] sm:$0xff] %v1781
          %1814 = vst [vmem:[#allocation3 + $0x38] sm:$0xff] %v1782
          %1815 = vst [vmem:[#allocation3 + $0x40] sm:$0xff] %v1783
          %1816 = vst [vmem:[#allocation3 + $0x48] sm:$0xff] %v1784
          %1817 = vst [vmem:[#allocation3 + $0x50] sm:$0xff] %v1785
          %1818 = vst [vmem:[#allocation3 + $0x58] sm:$0xff] %v1786
          %1819 = vst [vmem:[#allocation3 + $0x60] sm:$0xff] %v1787
          %1820 = vst [vmem:[#allocation3 + $0x68] sm:$0xff] %v1788
          %1821 = vst [vmem:[#allocation3 + $0x70] sm:$0xff] %v1789
          %1822 = vst [vmem:[#allocation3 + $0x78] sm:$0xff] %v1790
          %1823 = vst [vmem:[#allocation3 + $0x80] sm:$0xff] %v1791
          %1824 = vst [vmem:[#allocation3 + $0x88] sm:$0xff] %v1792
          %1825 = vst [vmem:[#allocation3 + $0x90] sm:$0xff] %v1793
          %1826 = vst [vmem:[#allocation3 + $0x98] sm:$0xff] %v1794
          %1827 = vst [vmem:[#allocation3 + $0xa0] sm:$0xff] %v1795
          %1828 = vst [vmem:[#allocation3 + $0xa8] sm:$0xff] %v1796
          %1829 = vst [vmem:[#allocation3 + $0xb0] sm:$0xff] %v1797
          %1830 = vst [vmem:[#allocation3 + $0xb8] sm:$0xff] %v1798
          %1831 = vst [vmem:[#allocation3 + $0xc0] sm:$0xff] %v1799
          %1832 = vst [vmem:[#allocation3 + $0xc8] sm:$0xff] %v1800
          %1833 = vst [vmem:[#allocation3 + $0xd0] sm:$0xff] %v1801
          %1834 = vst [vmem:[#allocation3 + $0xd8] sm:$0xff] %v1802
          %1835 = vst [vmem:[#allocation3 + $0xe0] sm:$0xff] %v1803
          %1836 = vst [vmem:[#allocation3 + $0xe8] sm:$0xff] %v1804
          %1837 = vst [vmem:[#allocation3 + $0xf0] sm:$0xff] %v1805
          %1838 = vst [vmem:[#allocation3 + $0xf8] sm:$0xff] %v1806
        $region110: #{tpu_custom_call.1} parent=89 // pred_fallthru
          _
        %p1839 = scmp.eq.s32.totalorder %s24, 1
        %p1840 = pnand %p1839, %p985
        %p1841 = pneg %p1840
        // Predicated region
        $region111: #{tpu_custom_call.1} parent=89 // pred_check
          _
        $region112: #{tpu_custom_call.1} parent=89 // pred_check_branch
          %1843 = sbr.rel (%p1840) target = $region114
        $region113: #{tpu_custom_call.1} parent=89 // pred_region
          %v1844 = vld [vmem:[#allocation3] sm:$0xff]
          %v1845 = vld [vmem:[#allocation3 + $0x8] sm:$0xff]
          %v1846 = vld [vmem:[#allocation3 + $0x10] sm:$0xff]
          %v1847 = vld [vmem:[#allocation3 + $0x18] sm:$0xff]
          %v1848 = vld [vmem:[#allocation3 + $0x20] sm:$0xff]
          %v1849 = vld [vmem:[#allocation3 + $0x28] sm:$0xff]
          %v1850 = vld [vmem:[#allocation3 + $0x30] sm:$0xff]
          %v1851 = vld [vmem:[#allocation3 + $0x38] sm:$0xff]
          %v1852 = vld [vmem:[#allocation3 + $0x40] sm:$0xff]
          %v1853 = vld [vmem:[#allocation3 + $0x48] sm:$0xff]
          %v1854 = vld [vmem:[#allocation3 + $0x50] sm:$0xff]
          %v1855 = vld [vmem:[#allocation3 + $0x58] sm:$0xff]
          %v1856 = vld [vmem:[#allocation3 + $0x60] sm:$0xff]
          %v1857 = vld [vmem:[#allocation3 + $0x68] sm:$0xff]
          %v1858 = vld [vmem:[#allocation3 + $0x70] sm:$0xff]
          %v1859 = vld [vmem:[#allocation3 + $0x78] sm:$0xff]
          %v1860 = vld [vmem:[#allocation3 + $0x80] sm:$0xff]
          %v1861 = vld [vmem:[#allocation3 + $0x88] sm:$0xff]
          %v1862 = vld [vmem:[#allocation3 + $0x90] sm:$0xff]
          %v1863 = vld [vmem:[#allocation3 + $0x98] sm:$0xff]
          %v1864 = vld [vmem:[#allocation3 + $0xa0] sm:$0xff]
          %v1865 = vld [vmem:[#allocation3 + $0xa8] sm:$0xff]
          %v1866 = vld [vmem:[#allocation3 + $0xb0] sm:$0xff]
          %v1867 = vld [vmem:[#allocation3 + $0xb8] sm:$0xff]
          %v1868 = vld [vmem:[#allocation3 + $0xc0] sm:$0xff]
          %v1869 = vld [vmem:[#allocation3 + $0xc8] sm:$0xff]
          %v1870 = vld [vmem:[#allocation3 + $0xd0] sm:$0xff]
          %v1871 = vld [vmem:[#allocation3 + $0xd8] sm:$0xff]
          %v1872 = vld [vmem:[#allocation3 + $0xe0] sm:$0xff]
          %v1873 = vld [vmem:[#allocation3 + $0xe8] sm:$0xff]
          %v1874 = vld [vmem:[#allocation3 + $0xf0] sm:$0xff]
          %v1875 = vld [vmem:[#allocation3 + $0xf8] sm:$0xff]
          %v1876 = vld [vmem:[%s5] sm:$0xff]
          %v1877 = vld [vmem:[%s5 + $0x8] sm:$0xff]
          %v1878 = vld [vmem:[%s5 + $0x10] sm:$0xff]
          %v1879 = vld [vmem:[%s5 + $0x18] sm:$0xff]
          %v1880 = vld [vmem:[%s5 + $0x20] sm:$0xff]
          %v1881 = vld [vmem:[%s5 + $0x28] sm:$0xff]
          %v1882 = vld [vmem:[%s5 + $0x30] sm:$0xff]
          %v1883 = vld [vmem:[%s5 + $0x38] sm:$0xff]
          %v1884 = vld [vmem:[%s5 + $0x40] sm:$0xff]
          %v1885 = vld [vmem:[%s5 + $0x48] sm:$0xff]
          %v1886 = vld [vmem:[%s5 + $0x50] sm:$0xff]
          %v1887 = vld [vmem:[%s5 + $0x58] sm:$0xff]
          %v1888 = vld [vmem:[%s5 + $0x60] sm:$0xff]
          %v1889 = vld [vmem:[%s5 + $0x68] sm:$0xff]
          %v1890 = vld [vmem:[%s5 + $0x70] sm:$0xff]
          %v1891 = vld [vmem:[%s5 + $0x78] sm:$0xff]
          %v1892 = vld [vmem:[%s5 + $0x80] sm:$0xff]
          %v1893 = vld [vmem:[%s5 + $0x88] sm:$0xff]
          %v1894 = vld [vmem:[%s5 + $0x90] sm:$0xff]
          %v1895 = vld [vmem:[%s5 + $0x98] sm:$0xff]
          %v1896 = vld [vmem:[%s5 + $0xa0] sm:$0xff]
          %v1897 = vld [vmem:[%s5 + $0xa8] sm:$0xff]
          %v1898 = vld [vmem:[%s5 + $0xb0] sm:$0xff]
          %v1899 = vld [vmem:[%s5 + $0xb8] sm:$0xff]
          %v1900 = vld [vmem:[%s5 + $0xc0] sm:$0xff]
          %v1901 = vld [vmem:[%s5 + $0xc8] sm:$0xff]
          %v1902 = vld [vmem:[%s5 + $0xd0] sm:$0xff]
          %v1903 = vld [vmem:[%s5 + $0xd8] sm:$0xff]
          %v1904 = vld [vmem:[%s5 + $0xe0] sm:$0xff]
          %v1905 = vld [vmem:[%s5 + $0xe8] sm:$0xff]
          %v1906 = vld [vmem:[%s5 + $0xf0] sm:$0xff]
          %v1907 = vld [vmem:[%s5 + $0xf8] sm:$0xff]
          %1909 = vset.pattern.permute.xlu0 0
          %1910 = vperm.xlu0 %1909, %v1876
          %v1911 = vpop.permute.xlu0 %1910
          %1914 = vset.pattern.permute.xlu0 0
          %1915 = vperm.xlu0 %1914, %v1877
          %v1916 = vpop.permute.xlu0 %1915
          %1919 = vset.pattern.permute.xlu0 0
          %1920 = vperm.xlu0 %1919, %v1878
          %v1921 = vpop.permute.xlu0 %1920
          %1924 = vset.pattern.permute.xlu0 0
          %1925 = vperm.xlu0 %1924, %v1879
          %v1926 = vpop.permute.xlu0 %1925
          %1929 = vset.pattern.permute.xlu0 0
          %1930 = vperm.xlu0 %1929, %v1880
          %v1931 = vpop.permute.xlu0 %1930
          %1934 = vset.pattern.permute.xlu0 0
          %1935 = vperm.xlu0 %1934, %v1881
          %v1936 = vpop.permute.xlu0 %1935
          %1939 = vset.pattern.permute.xlu0 0
          %1940 = vperm.xlu0 %1939, %v1882
          %v1941 = vpop.permute.xlu0 %1940
          %1944 = vset.pattern.permute.xlu0 0
          %1945 = vperm.xlu0 %1944, %v1883
          %v1946 = vpop.permute.xlu0 %1945
          %1949 = vset.pattern.permute.xlu0 0
          %1950 = vperm.xlu0 %1949, %v1884
          %v1951 = vpop.permute.xlu0 %1950
          %1954 = vset.pattern.permute.xlu0 0
          %1955 = vperm.xlu0 %1954, %v1885
          %v1956 = vpop.permute.xlu0 %1955
          %1959 = vset.pattern.permute.xlu0 0
          %1960 = vperm.xlu0 %1959, %v1886
          %v1961 = vpop.permute.xlu0 %1960
          %1964 = vset.pattern.permute.xlu0 0
          %1965 = vperm.xlu0 %1964, %v1887
          %v1966 = vpop.permute.xlu0 %1965
          %1969 = vset.pattern.permute.xlu0 0
          %1970 = vperm.xlu0 %1969, %v1888
          %v1971 = vpop.permute.xlu0 %1970
          %1974 = vset.pattern.permute.xlu0 0
          %1975 = vperm.xlu0 %1974, %v1889
          %v1976 = vpop.permute.xlu0 %1975
          %1979 = vset.pattern.permute.xlu0 0
          %1980 = vperm.xlu0 %1979, %v1890
          %v1981 = vpop.permute.xlu0 %1980
          %1984 = vset.pattern.permute.xlu0 0
          %1985 = vperm.xlu0 %1984, %v1891
          %v1986 = vpop.permute.xlu0 %1985
          %1989 = vset.pattern.permute.xlu0 0
          %1990 = vperm.xlu0 %1989, %v1892
          %v1991 = vpop.permute.xlu0 %1990
          %1994 = vset.pattern.permute.xlu0 0
          %1995 = vperm.xlu0 %1994, %v1893
          %v1996 = vpop.permute.xlu0 %1995
          %1999 = vset.pattern.permute.xlu0 0
          %2000 = vperm.xlu0 %1999, %v1894
          %v2001 = vpop.permute.xlu0 %2000
          %2004 = vset.pattern.permute.xlu0 0
          %2005 = vperm.xlu0 %2004, %v1895
          %v2006 = vpop.permute.xlu0 %2005
          %2009 = vset.pattern.permute.xlu0 0
          %2010 = vperm.xlu0 %2009, %v1896
          %v2011 = vpop.permute.xlu0 %2010
          %2014 = vset.pattern.permute.xlu0 0
          %2015 = vperm.xlu0 %2014, %v1897
          %v2016 = vpop.permute.xlu0 %2015
          %2019 = vset.pattern.permute.xlu0 0
          %2020 = vperm.xlu0 %2019, %v1898
          %v2021 = vpop.permute.xlu0 %2020
          %2024 = vset.pattern.permute.xlu0 0
          %2025 = vperm.xlu0 %2024, %v1899
          %v2026 = vpop.permute.xlu0 %2025
          %2029 = vset.pattern.permute.xlu0 0
          %2030 = vperm.xlu0 %2029, %v1900
          %v2031 = vpop.permute.xlu0 %2030
          %2034 = vset.pattern.permute.xlu0 0
          %2035 = vperm.xlu0 %2034, %v1901
          %v2036 = vpop.permute.xlu0 %2035
          %2039 = vset.pattern.permute.xlu0 0
          %2040 = vperm.xlu0 %2039, %v1902
          %v2041 = vpop.permute.xlu0 %2040
          %2044 = vset.pattern.permute.xlu0 0
          %2045 = vperm.xlu0 %2044, %v1903
          %v2046 = vpop.permute.xlu0 %2045
          %2049 = vset.pattern.permute.xlu0 0
          %2050 = vperm.xlu0 %2049, %v1904
          %v2051 = vpop.permute.xlu0 %2050
          %2054 = vset.pattern.permute.xlu0 0
          %2055 = vperm.xlu0 %2054, %v1905
          %v2056 = vpop.permute.xlu0 %2055
          %2059 = vset.pattern.permute.xlu0 0
          %2060 = vperm.xlu0 %2059, %v1906
          %v2061 = vpop.permute.xlu0 %2060
          %2064 = vset.pattern.permute.xlu0 0
          %2065 = vperm.xlu0 %2064, %v1907
          %v2066 = vpop.permute.xlu0 %2065
          %v2068 = vmul.f32 %v1844, %v1911
          %v2069 = vmul.f32 %v1845, %v1916
          %v2070 = vmul.f32 %v1846, %v1921
          %v2071 = vmul.f32 %v1847, %v1926
          %v2072 = vmul.f32 %v1848, %v1931
          %v2073 = vmul.f32 %v1849, %v1936
          %v2074 = vmul.f32 %v1850, %v1941
          %v2075 = vmul.f32 %v1851, %v1946
          %v2076 = vmul.f32 %v1852, %v1951
          %v2077 = vmul.f32 %v1853, %v1956
          %v2078 = vmul.f32 %v1854, %v1961
          %v2079 = vmul.f32 %v1855, %v1966
          %v2080 = vmul.f32 %v1856, %v1971
          %v2081 = vmul.f32 %v1857, %v1976
          %v2082 = vmul.f32 %v1858, %v1981
          %v2083 = vmul.f32 %v1859, %v1986
          %v2084 = vmul.f32 %v1860, %v1991
          %v2085 = vmul.f32 %v1861, %v1996
          %v2086 = vmul.f32 %v1862, %v2001
          %v2087 = vmul.f32 %v1863, %v2006
          %v2088 = vmul.f32 %v1864, %v2011
          %v2089 = vmul.f32 %v1865, %v2016
          %v2090 = vmul.f32 %v1866, %v2021
          %v2091 = vmul.f32 %v1867, %v2026
          %v2092 = vmul.f32 %v1868, %v2031
          %v2093 = vmul.f32 %v1869, %v2036
          %v2094 = vmul.f32 %v1870, %v2041
          %v2095 = vmul.f32 %v1871, %v2046
          %v2096 = vmul.f32 %v1872, %v2051
          %v2097 = vmul.f32 %v1873, %v2056
          %v2098 = vmul.f32 %v1874, %v2061
          %v2099 = vmul.f32 %v1875, %v2066
          %v2100 = vpack.c.bf16 %v2069, %v2068
          %v2101 = vpack.c.bf16 %v2071, %v2070
          %v2102 = vpack.c.bf16 %v2073, %v2072
          %v2103 = vpack.c.bf16 %v2075, %v2074
          %v2104 = vpack.c.bf16 %v2077, %v2076
          %v2105 = vpack.c.bf16 %v2079, %v2078
          %v2106 = vpack.c.bf16 %v2081, %v2080
          %v2107 = vpack.c.bf16 %v2083, %v2082
          %v2108 = vpack.c.bf16 %v2085, %v2084
          %v2109 = vpack.c.bf16 %v2087, %v2086
          %v2110 = vpack.c.bf16 %v2089, %v2088
          %v2111 = vpack.c.bf16 %v2091, %v2090
          %v2112 = vpack.c.bf16 %v2093, %v2092
          %v2113 = vpack.c.bf16 %v2095, %v2094
          %v2114 = vpack.c.bf16 %v2097, %v2096
          %v2115 = vpack.c.bf16 %v2099, %v2098
          %v2116 = vld [vmem:[%s6] sm:$0xf]
          %v2117 = vld [vmem:[%s6 + $0x4] sm:$0xf]
          %v2118 = vld [vmem:[%s6 + $0x8] sm:$0xf]
          %v2119 = vld [vmem:[%s6 + $0xc] sm:$0xf]
          %v2120 = vld [vmem:[%s6 + $0x10] sm:$0xf]
          %v2121 = vld [vmem:[%s6 + $0x14] sm:$0xf]
          %v2122 = vld [vmem:[%s6 + $0x18] sm:$0xf]
          %v2123 = vld [vmem:[%s6 + $0x1c] sm:$0xf]
          %v2124 = vld [vmem:[%s6 + $0x20] sm:$0xf]
          %v2125 = vld [vmem:[%s6 + $0x24] sm:$0xf]
          %v2126 = vld [vmem:[%s6 + $0x28] sm:$0xf]
          %v2127 = vld [vmem:[%s6 + $0x2c] sm:$0xf]
          %v2128 = vld [vmem:[%s6 + $0x30] sm:$0xf]
          %v2129 = vld [vmem:[%s6 + $0x34] sm:$0xf]
          %v2130 = vld [vmem:[%s6 + $0x38] sm:$0xf]
          %v2131 = vld [vmem:[%s6 + $0x3c] sm:$0xf]
          %v2148 = vunpack.c.l.b16 %v2116
          %v2149 = vunpack.c.l.b16 %v2117
          %v2150 = vunpack.c.l.b16 %v2118
          %v2151 = vunpack.c.l.b16 %v2119
          %v2152 = vunpack.c.l.b16 %v2120
          %v2153 = vunpack.c.l.b16 %v2121
          %v2154 = vunpack.c.l.b16 %v2122
          %v2155 = vunpack.c.l.b16 %v2123
          %v2156 = vunpack.c.l.b16 %v2124
          %v2157 = vunpack.c.l.b16 %v2125
          %v2158 = vunpack.c.l.b16 %v2126
          %v2159 = vunpack.c.l.b16 %v2127
          %v2160 = vunpack.c.l.b16 %v2128
          %v2161 = vunpack.c.l.b16 %v2129
          %v2162 = vunpack.c.l.b16 %v2130
          %v2163 = vunpack.c.l.b16 %v2131
          %v2164 = vpack.c.b16 %v2149, %v2148
          %v2165 = vpack.c.b16 %v2151, %v2150
          %v2166 = vpack.c.b16 %v2153, %v2152
          %v2167 = vpack.c.b16 %v2155, %v2154
          %v2168 = vpack.c.b16 %v2157, %v2156
          %v2169 = vpack.c.b16 %v2159, %v2158
          %v2170 = vpack.c.b16 %v2161, %v2160
          %v2171 = vpack.c.b16 %v2163, %v2162
          %2180 = vmatprep.subr.bf16.mxu0 0
          %2181 = vmatpush1.bf16.msra.mxu0 %v2164
          %2182 = vmatprep.subr.bf16.mxu0 0
          %2183 = vmatpush1.bf16.msra.mxu0 %v2165
          %2184 = vmatprep.subr.bf16.mxu0 0
          %2185 = vmatpush1.bf16.msra.mxu0 %v2166
          %2186 = vmatprep.subr.bf16.mxu0 0
          %2187 = vmatpush1.bf16.msra.mxu0 %v2167
          %2188 = vmatprep.subr.bf16.mxu0 0
          %2189 = vmatpush1.bf16.msra.mxu0 %v2168
          %2190 = vmatprep.subr.bf16.mxu0 0
          %2191 = vmatpush1.bf16.msra.mxu0 %v2169
          %2192 = vmatprep.subr.bf16.mxu0 0
          %2193 = vmatpush1.bf16.msra.mxu0 %v2170
          %2194 = vmatprep.subr.bf16.mxu0 0
          %2195 = vmatpush1.bf16.msra.mxu0 %v2171
          %2196 = vmatprep.subr.bf16.mxu0 0
          %2197 = vmatpush1.bf16.msra.mxu0 0
          %2198 = vmatprep.subr.bf16.mxu0 0
          %2199 = vmatpush1.bf16.msra.mxu0 0
          %2200 = vmatprep.subr.bf16.mxu0 0
          %2201 = vmatpush1.bf16.msra.mxu0 0
          %2202 = vmatprep.subr.bf16.mxu0 0
          %2203 = vmatpush1.bf16.msra.mxu0 0
          %2204 = vmatprep.subr.bf16.mxu0 0
          %2205 = vmatpush1.bf16.msra.mxu0 0
          %2206 = vmatprep.subr.bf16.mxu0 0
          %2207 = vmatpush1.bf16.msra.mxu0 0
          %2208 = vmatprep.subr.bf16.mxu0 0
          %2209 = vmatpush1.bf16.msra.mxu0 0
          %2210 = vmatprep.subr.bf16.mxu0 0
          %2211 = vmatpush1.bf16.msra.mxu0 0
          %2212 = vmatprep.mubr.bf16.mxu0 0
          %2213 = vmatmul.mubr.bf16.gmra.mrb[0].mxu0 %v2100
          %v2214 = vpop.f32.mrb[0].mxu0
          %v2215 = vadd.f32 0.0, %v2214
          %v2216 = vpop.f32.mrb[0].mxu0
          %v2217 = vpop.f32.mrb[0].mxu0
          %v2218 = vadd.f32 0.0, %v2217
          %v2219 = vpop.f32.mrb[0].mxu0
          %2220 = vmatprep.mubr.bf16.mxu0 0
          %2221 = vmatmul.mubr.bf16.gmra.mrb[0].mxu0 %v2101
          %v2222 = vpop.f32.mrb[0].mxu0
          %v2223 = vadd.f32 0.0, %v2222
          %v2224 = vpop.f32.mrb[0].mxu0
          %v2225 = vpop.f32.mrb[0].mxu0
          %v2226 = vadd.f32 0.0, %v2225
          %v2227 = vpop.f32.mrb[0].mxu0
          %2228 = vmatprep.mubr.bf16.mxu0 0
          %2229 = vmatmul.mubr.bf16.gmra.mrb[0].mxu0 %v2102
          %v2230 = vpop.f32.mrb[0].mxu0
          %v2231 = vadd.f32 0.0, %v2230
          %v2232 = vpop.f32.mrb[0].mxu0
          %v2233 = vpop.f32.mrb[0].mxu0
          %v2234 = vadd.f32 0.0, %v2233
          %v2235 = vpop.f32.mrb[0].mxu0
          %2236 = vmatprep.mubr.bf16.mxu0 0
          %2237 = vmatmul.mubr.bf16.gmra.mrb[0].mxu0 %v2103
          %v2238 = vpop.f32.mrb[0].mxu0
          %v2239 = vadd.f32 0.0, %v2238
          %v2240 = vpop.f32.mrb[0].mxu0
          %v2241 = vpop.f32.mrb[0].mxu0
          %v2242 = vadd.f32 0.0, %v2241
          %v2243 = vpop.f32.mrb[0].mxu0
          %2244 = vmatprep.mubr.bf16.mxu0 0
          %2245 = vmatmul.mubr.bf16.gmra.mrb[0].mxu0 %v2104
          %v2246 = vpop.f32.mrb[0].mxu0
          %v2247 = vadd.f32 0.0, %v2246
          %v2248 = vpop.f32.mrb[0].mxu0
          %v2249 = vpop.f32.mrb[0].mxu0
          %v2250 = vadd.f32 0.0, %v2249
          %v2251 = vpop.f32.mrb[0].mxu0
          %2252 = vmatprep.mubr.bf16.mxu0 0
          %2253 = vmatmul.mubr.bf16.gmra.mrb[0].mxu0 %v2105
          %v2254 = vpop.f32.mrb[0].mxu0
          %v2255 = vadd.f32 0.0, %v2254
          %v2256 = vpop.f32.mrb[0].mxu0
          %v2257 = vpop.f32.mrb[0].mxu0
          %v2258 = vadd.f32 0.0, %v2257
          %v2259 = vpop.f32.mrb[0].mxu0
          %2260 = vmatprep.mubr.bf16.mxu0 0
          %2261 = vmatmul.mubr.bf16.gmra.mrb[0].mxu0 %v2106
          %v2262 = vpop.f32.mrb[0].mxu0
          %v2263 = vadd.f32 0.0, %v2262
          %v2264 = vpop.f32.mrb[0].mxu0
          %v2265 = vpop.f32.mrb[0].mxu0
          %v2266 = vadd.f32 0.0, %v2265
          %v2267 = vpop.f32.mrb[0].mxu0
          %2268 = vmatprep.mubr.bf16.mxu0 0
          %2269 = vmatmul.mubr.bf16.gmra.mrb[0].mxu0 %v2107
          %v2270 = vpop.f32.mrb[0].mxu0
          %v2271 = vadd.f32 0.0, %v2270
          %v2272 = vpop.f32.mrb[0].mxu0
          %v2273 = vpop.f32.mrb[0].mxu0
          %v2274 = vadd.f32 0.0, %v2273
          %v2275 = vpop.f32.mrb[0].mxu0
          %2276 = vmatprep.mubr.bf16.mxu0 0
          %2277 = vmatmul.mubr.bf16.gmra.mrb[0].mxu0 %v2108
          %v2278 = vpop.f32.mrb[0].mxu0
          %v2279 = vadd.f32 0.0, %v2278
          %v2280 = vpop.f32.mrb[0].mxu0
          %v2281 = vpop.f32.mrb[0].mxu0
          %v2282 = vadd.f32 0.0, %v2281
          %v2283 = vpop.f32.mrb[0].mxu0
          %2284 = vmatprep.mubr.bf16.mxu0 0
          %2285 = vmatmul.mubr.bf16.gmra.mrb[0].mxu0 %v2109
          %v2286 = vpop.f32.mrb[0].mxu0
          %v2287 = vadd.f32 0.0, %v2286
          %v2288 = vpop.f32.mrb[0].mxu0
          %v2289 = vpop.f32.mrb[0].mxu0
          %v2290 = vadd.f32 0.0, %v2289
          %v2291 = vpop.f32.mrb[0].mxu0
          %2292 = vmatprep.mubr.bf16.mxu0 0
          %2293 = vmatmul.mubr.bf16.gmra.mrb[0].mxu0 %v2110
          %v2294 = vpop.f32.mrb[0].mxu0
          %v2295 = vadd.f32 0.0, %v2294
          %v2296 = vpop.f32.mrb[0].mxu0
          %v2297 = vpop.f32.mrb[0].mxu0
          %v2298 = vadd.f32 0.0, %v2297
          %v2299 = vpop.f32.mrb[0].mxu0
          %2300 = vmatprep.mubr.bf16.mxu0 0
          %2301 = vmatmul.mubr.bf16.gmra.mrb[0].mxu0 %v2111
          %v2302 = vpop.f32.mrb[0].mxu0
          %v2303 = vadd.f32 0.0, %v2302
          %v2304 = vpop.f32.mrb[0].mxu0
          %v2305 = vpop.f32.mrb[0].mxu0
          %v2306 = vadd.f32 0.0, %v2305
          %v2307 = vpop.f32.mrb[0].mxu0
          %2308 = vmatprep.mubr.bf16.mxu0 0
          %2309 = vmatmul.mubr.bf16.gmra.mrb[0].mxu0 %v2112
          %v2310 = vpop.f32.mrb[0].mxu0
          %v2311 = vadd.f32 0.0, %v2310
          %v2312 = vpop.f32.mrb[0].mxu0
          %v2313 = vpop.f32.mrb[0].mxu0
          %v2314 = vadd.f32 0.0, %v2313
          %v2315 = vpop.f32.mrb[0].mxu0
          %2316 = vmatprep.mubr.bf16.mxu0 0
          %2317 = vmatmul.mubr.bf16.gmra.mrb[0].mxu0 %v2113
          %v2318 = vpop.f32.mrb[0].mxu0
          %v2319 = vadd.f32 0.0, %v2318
          %v2320 = vpop.f32.mrb[0].mxu0
          %v2321 = vpop.f32.mrb[0].mxu0
          %v2322 = vadd.f32 0.0, %v2321
          %v2323 = vpop.f32.mrb[0].mxu0
          %2324 = vmatprep.mubr.bf16.mxu0 0
          %2325 = vmatmul.mubr.bf16.gmra.mrb[0].mxu0 %v2114
          %v2326 = vpop.f32.mrb[0].mxu0
          %v2327 = vadd.f32 0.0, %v2326
          %v2328 = vpop.f32.mrb[0].mxu0
          %v2329 = vpop.f32.mrb[0].mxu0
          %v2330 = vadd.f32 0.0, %v2329
          %v2331 = vpop.f32.mrb[0].mxu0
          %2332 = vmatprep.mubr.bf16.mxu0 0
          %2333 = vmatmul.mubr.bf16.gmra.mrb[0].mxu0 %v2115
          %v2334 = vpop.f32.mrb[0].mxu0
          %v2335 = vadd.f32 0.0, %v2334
          %v2336 = vpop.f32.mrb[0].mxu0
          %v2337 = vpop.f32.mrb[0].mxu0
          %v2338 = vadd.f32 0.0, %v2337
          %v2339 = vpop.f32.mrb[0].mxu0
          %2340 = vdwg.mxu0
          %v2341 = vmax.f32 %v2215, 0.0
          %v2342 = vmax.f32 %v2218, 0.0
          %v2343 = vmax.f32 %v2223, 0.0
          %v2344 = vmax.f32 %v2226, 0.0
          %v2345 = vmax.f32 %v2231, 0.0
          %v2346 = vmax.f32 %v2234, 0.0
          %v2347 = vmax.f32 %v2239, 0.0
          %v2348 = vmax.f32 %v2242, 0.0
          %v2349 = vmax.f32 %v2247, 0.0
          %v2350 = vmax.f32 %v2250, 0.0
          %v2351 = vmax.f32 %v2255, 0.0
          %v2352 = vmax.f32 %v2258, 0.0
          %v2353 = vmax.f32 %v2263, 0.0
          %v2354 = vmax.f32 %v2266, 0.0
          %v2355 = vmax.f32 %v2271, 0.0
          %v2356 = vmax.f32 %v2274, 0.0
          %v2357 = vmax.f32 %v2279, 0.0
          %v2358 = vmax.f32 %v2282, 0.0
          %v2359 = vmax.f32 %v2287, 0.0
          %v2360 = vmax.f32 %v2290, 0.0
          %v2361 = vmax.f32 %v2295, 0.0
          %v2362 = vmax.f32 %v2298, 0.0
          %v2363 = vmax.f32 %v2303, 0.0
          %v2364 = vmax.f32 %v2306, 0.0
          %v2365 = vmax.f32 %v2311, 0.0
          %v2366 = vmax.f32 %v2314, 0.0
          %v2367 = vmax.f32 %v2319, 0.0
          %v2368 = vmax.f32 %v2322, 0.0
          %v2369 = vmax.f32 %v2327, 0.0
          %v2370 = vmax.f32 %v2330, 0.0
          %v2371 = vmax.f32 %v2335, 0.0
          %v2372 = vmax.f32 %v2338, 0.0
          %v2373 = vadd.f32 %v2341, %v2357
          %v2374 = vadd.f32 %v2342, %v2358
          %v2375 = vadd.f32 %v2343, %v2359
          %v2376 = vadd.f32 %v2344, %v2360
          %v2377 = vadd.f32 %v2345, %v2361
          %v2378 = vadd.f32 %v2346, %v2362
          %v2379 = vadd.f32 %v2347, %v2363
          %v2380 = vadd.f32 %v2348, %v2364
          %v2381 = vadd.f32 %v2349, %v2365
          %v2382 = vadd.f32 %v2350, %v2366
          %v2383 = vadd.f32 %v2351, %v2367
          %v2384 = vadd.f32 %v2352, %v2368
          %v2385 = vadd.f32 %v2353, %v2369
          %v2386 = vadd.f32 %v2354, %v2370
          %v2387 = vadd.f32 %v2355, %v2371
          %v2388 = vadd.f32 %v2356, %v2372
          %v2389 = vmul.f32 %v2373, 0.5
          %v2390 = vmul.f32 %v2374, 0.5
          %v2391 = vmul.f32 %v2375, 0.5
          %v2392 = vmul.f32 %v2376, 0.5
          %v2393 = vmul.f32 %v2377, 0.5
          %v2394 = vmul.f32 %v2378, 0.5
          %v2395 = vmul.f32 %v2379, 0.5
          %v2396 = vmul.f32 %v2380, 0.5
          %v2397 = vmul.f32 %v2381, 0.5
          %v2398 = vmul.f32 %v2382, 0.5
          %v2399 = vmul.f32 %v2383, 0.5
          %v2400 = vmul.f32 %v2384, 0.5
          %v2401 = vmul.f32 %v2385, 0.5
          %v2402 = vmul.f32 %v2386, 0.5
          %v2403 = vmul.f32 %v2387, 0.5
          %v2404 = vmul.f32 %v2388, 0.5
          %v2405 = vpack.c.bf16 %v2390, %v2389
          %v2406 = vpack.c.bf16 %v2392, %v2391
          %v2407 = vpack.c.bf16 %v2394, %v2393
          %v2408 = vpack.c.bf16 %v2396, %v2395
          %v2409 = vpack.c.bf16 %v2398, %v2397
          %v2410 = vpack.c.bf16 %v2400, %v2399
          %v2411 = vpack.c.bf16 %v2402, %v2401
          %v2412 = vpack.c.bf16 %v2404, %v2403
          %v2413 = vld [vmem:[%s7] sm:$0xf]
          %v2414 = vld [vmem:[%s7 + $0x4] sm:$0xf]
          %v2415 = vld [vmem:[%s7 + $0x8] sm:$0xf]
          %v2416 = vld [vmem:[%s7 + $0xc] sm:$0xf]
          %v2417 = vld [vmem:[%s7 + $0x10] sm:$0xf]
          %v2418 = vld [vmem:[%s7 + $0x14] sm:$0xf]
          %v2419 = vld [vmem:[%s7 + $0x18] sm:$0xf]
          %v2420 = vld [vmem:[%s7 + $0x1c] sm:$0xf]
          %v2421 = vld [vmem:[%s7 + $0x20] sm:$0xf]
          %v2422 = vld [vmem:[%s7 + $0x24] sm:$0xf]
          %v2423 = vld [vmem:[%s7 + $0x28] sm:$0xf]
          %v2424 = vld [vmem:[%s7 + $0x2c] sm:$0xf]
          %v2425 = vld [vmem:[%s7 + $0x30] sm:$0xf]
          %v2426 = vld [vmem:[%s7 + $0x34] sm:$0xf]
          %v2427 = vld [vmem:[%s7 + $0x38] sm:$0xf]
          %v2428 = vld [vmem:[%s7 + $0x3c] sm:$0xf]
          %v2445 = vunpack.c.l.b16 %v2413
          %v2446 = vunpack.c.l.b16 %v2414
          %v2447 = vunpack.c.l.b16 %v2415
          %v2448 = vunpack.c.l.b16 %v2416
          %v2449 = vunpack.c.l.b16 %v2417
          %v2450 = vunpack.c.l.b16 %v2418
          %v2451 = vunpack.c.l.b16 %v2419
          %v2452 = vunpack.c.l.b16 %v2420
          %v2453 = vunpack.c.l.b16 %v2421
          %v2454 = vunpack.c.l.b16 %v2422
          %v2455 = vunpack.c.l.b16 %v2423
          %v2456 = vunpack.c.l.b16 %v2424
          %v2457 = vunpack.c.l.b16 %v2425
          %v2458 = vunpack.c.l.b16 %v2426
          %v2459 = vunpack.c.l.b16 %v2427
          %v2460 = vunpack.c.l.b16 %v2428
          %v2461 = vpack.c.b16 %v2446, %v2445
          %v2462 = vpack.c.b16 %v2448, %v2447
          %v2463 = vpack.c.b16 %v2450, %v2449
          %v2464 = vpack.c.b16 %v2452, %v2451
          %v2465 = vpack.c.b16 %v2454, %v2453
          %v2466 = vpack.c.b16 %v2456, %v2455
          %v2467 = vpack.c.b16 %v2458, %v2457
          %v2468 = vpack.c.b16 %v2460, %v2459
          %2477 = vmatprep.subr.bf16.mxu0 0
          %2478 = vmatpush1.bf16.msra.mxu0 %v2461
          %2479 = vmatprep.subr.bf16.mxu0 0
          %2480 = vmatpush1.bf16.msra.mxu0 %v2462
          %2481 = vmatprep.subr.bf16.mxu0 0
          %2482 = vmatpush1.bf16.msra.mxu0 %v2463
          %2483 = vmatprep.subr.bf16.mxu0 0
          %2484 = vmatpush1.bf16.msra.mxu0 %v2464
          %2485 = vmatprep.subr.bf16.mxu0 0
          %2486 = vmatpush1.bf16.msra.mxu0 %v2465
          %2487 = vmatprep.subr.bf16.mxu0 0
          %2488 = vmatpush1.bf16.msra.mxu0 %v2466
          %2489 = vmatprep.subr.bf16.mxu0 0
          %2490 = vmatpush1.bf16.msra.mxu0 %v2467
          %2491 = vmatprep.subr.bf16.mxu0 0
          %2492 = vmatpush1.bf16.msra.mxu0 %v2468
          %2493 = vmatprep.subr.bf16.mxu0 0
          %2494 = vmatpush1.bf16.msra.mxu0 0
          %2495 = vmatprep.subr.bf16.mxu0 0
          %2496 = vmatpush1.bf16.msra.mxu0 0
          %2497 = vmatprep.subr.bf16.mxu0 0
          %2498 = vmatpush1.bf16.msra.mxu0 0
          %2499 = vmatprep.subr.bf16.mxu0 0
          %2500 = vmatpush1.bf16.msra.mxu0 0
          %2501 = vmatprep.subr.bf16.mxu0 0
          %2502 = vmatpush1.bf16.msra.mxu0 0
          %2503 = vmatprep.subr.bf16.mxu0 0
          %2504 = vmatpush1.bf16.msra.mxu0 0
          %2505 = vmatprep.subr.bf16.mxu0 0
          %2506 = vmatpush1.bf16.msra.mxu0 0
          %2507 = vmatprep.subr.bf16.mxu0 0
          %2508 = vmatpush1.bf16.msra.mxu0 0
          %2509 = vmatprep.mubr.bf16.mxu0 0
          %2510 = vmatmul.mubr.bf16.gmra.mrb[0].mxu0 %v2405
          %v2511 = vpop.f32.mrb[0].mxu0
          %v2512 = vadd.f32 0.0, %v2511
          %v2513 = vpop.f32.mrb[0].mxu0
          %v2514 = vpop.f32.mrb[0].mxu0
          %v2515 = vadd.f32 0.0, %v2514
          %v2516 = vpop.f32.mrb[0].mxu0
          %2517 = vmatprep.mubr.bf16.mxu0 0
          %2518 = vmatmul.mubr.bf16.gmra.mrb[0].mxu0 %v2406
          %v2519 = vpop.f32.mrb[0].mxu0
          %v2520 = vadd.f32 0.0, %v2519
          %v2521 = vpop.f32.mrb[0].mxu0
          %v2522 = vpop.f32.mrb[0].mxu0
          %v2523 = vadd.f32 0.0, %v2522
          %v2524 = vpop.f32.mrb[0].mxu0
          %2525 = vmatprep.mubr.bf16.mxu0 0
          %2526 = vmatmul.mubr.bf16.gmra.mrb[0].mxu0 %v2407
          %v2527 = vpop.f32.mrb[0].mxu0
          %v2528 = vadd.f32 0.0, %v2527
          %v2529 = vpop.f32.mrb[0].mxu0
          %v2530 = vpop.f32.mrb[0].mxu0
          %v2531 = vadd.f32 0.0, %v2530
          %v2532 = vpop.f32.mrb[0].mxu0
          %2533 = vmatprep.mubr.bf16.mxu0 0
          %2534 = vmatmul.mubr.bf16.gmra.mrb[0].mxu0 %v2408
          %v2535 = vpop.f32.mrb[0].mxu0
          %v2536 = vadd.f32 0.0, %v2535
          %v2537 = vpop.f32.mrb[0].mxu0
          %v2538 = vpop.f32.mrb[0].mxu0
          %v2539 = vadd.f32 0.0, %v2538
          %v2540 = vpop.f32.mrb[0].mxu0
          %2541 = vmatprep.mubr.bf16.mxu0 0
          %2542 = vmatmul.mubr.bf16.gmra.mrb[0].mxu0 %v2409
          %v2543 = vpop.f32.mrb[0].mxu0
          %v2544 = vadd.f32 0.0, %v2543
          %v2545 = vpop.f32.mrb[0].mxu0
          %v2546 = vpop.f32.mrb[0].mxu0
          %v2547 = vadd.f32 0.0, %v2546
          %v2548 = vpop.f32.mrb[0].mxu0
          %2549 = vmatprep.mubr.bf16.mxu0 0
          %2550 = vmatmul.mubr.bf16.gmra.mrb[0].mxu0 %v2410
          %v2551 = vpop.f32.mrb[0].mxu0
          %v2552 = vadd.f32 0.0, %v2551
          %v2553 = vpop.f32.mrb[0].mxu0
          %v2554 = vpop.f32.mrb[0].mxu0
          %v2555 = vadd.f32 0.0, %v2554
          %v2556 = vpop.f32.mrb[0].mxu0
          %2557 = vmatprep.mubr.bf16.mxu0 0
          %2558 = vmatmul.mubr.bf16.gmra.mrb[0].mxu0 %v2411
          %v2559 = vpop.f32.mrb[0].mxu0
          %v2560 = vadd.f32 0.0, %v2559
          %v2561 = vpop.f32.mrb[0].mxu0
          %v2562 = vpop.f32.mrb[0].mxu0
          %v2563 = vadd.f32 0.0, %v2562
          %v2564 = vpop.f32.mrb[0].mxu0
          %2565 = vmatprep.mubr.bf16.mxu0 0
          %2566 = vmatmul.mubr.bf16.gmra.mrb[0].mxu0 %v2412
          %v2567 = vpop.f32.mrb[0].mxu0
          %v2568 = vadd.f32 0.0, %v2567
          %v2569 = vpop.f32.mrb[0].mxu0
          %v2570 = vpop.f32.mrb[0].mxu0
          %v2571 = vadd.f32 0.0, %v2570
          %v2572 = vpop.f32.mrb[0].mxu0
          %2573 = vdwg.mxu0
          %2574 = vst [vmem:[#allocation6] sm:$0xff] %v2512
          %2575 = vst [vmem:[#allocation6 + $0x8] sm:$0xff] %v2515
          %2576 = vst [vmem:[#allocation6 + $0x10] sm:$0xff] %v2520
          %2577 = vst [vmem:[#allocation6 + $0x18] sm:$0xff] %v2523
          %2578 = vst [vmem:[#allocation6 + $0x20] sm:$0xff] %v2528
          %2579 = vst [vmem:[#allocation6 + $0x28] sm:$0xff] %v2531
          %2580 = vst [vmem:[#allocation6 + $0x30] sm:$0xff] %v2536
          %2581 = vst [vmem:[#allocation6 + $0x38] sm:$0xff] %v2539
          %2582 = vst [vmem:[#allocation6 + $0x40] sm:$0xff] %v2544
          %2583 = vst [vmem:[#allocation6 + $0x48] sm:$0xff] %v2547
          %2584 = vst [vmem:[#allocation6 + $0x50] sm:$0xff] %v2552
          %2585 = vst [vmem:[#allocation6 + $0x58] sm:$0xff] %v2555
          %2586 = vst [vmem:[#allocation6 + $0x60] sm:$0xff] %v2560
          %2587 = vst [vmem:[#allocation6 + $0x68] sm:$0xff] %v2563
          %2588 = vst [vmem:[#allocation6 + $0x70] sm:$0xff] %v2568
          %2589 = vst [vmem:[#allocation6 + $0x78] sm:$0xff] %v2571
        $region114: #{tpu_custom_call.1} parent=89 // pred_fallthru
          _
        // Predicated region
        $region115: #{tpu_custom_call.1} parent=89 // pred_check
          %p2590 = pneg %p235
        $region116: #{tpu_custom_call.1} parent=89 // pred_check_branch
          %2592 = sbr.rel (%p2590) target = $region118
        $region117: #{tpu_custom_call.1} parent=89 // pred_region
          %s2594 = ssub.s32 2048, 2048
          %2595 = vsyncadd [#allocation7], %s2594
          %s2596 = sshll.u32 [#allocation6], 4
          %s2597 = int_to_ptr.vmem [resolvable:$true] %s2596
          %2602 = dma.vmem_to_hbm [thread:$0]  %s2597, 2048, %s8, [#allocation7], 128, 128, 8
        $region118: #{tpu_custom_call.1} parent=89 // pred_fallthru
          _
        // Predicated region
        $region119: #{tpu_custom_call.1} parent=89 // pred_check
          %p2603 = pneg %p235
        $region120: #{tpu_custom_call.1} parent=89 // pred_check_branch
          %2605 = sbr.rel (%p2603) target = $region122
        $region121: #{tpu_custom_call.1} parent=89 // pred_region
          %2606 = dma.done [#allocation7], 2048
        $region122: #{tpu_custom_call.1} parent=89 // pred_fallthru
          _
      $region90: #{tpu_custom_call.1} parent=5 // pred_fallthru
        _
      %p2607 = scmp.le.s32.totalorder 2, %s15
      // Predicated region
      $region123: #{tpu_custom_call.1} parent=5 // pred_check
        %p2608 = pneg %p2607
      $region124: #{tpu_custom_call.1} parent=5 // pred_check_branch
        %2610 = sbr.rel (%p2608) target = $region126
      $region125: #{tpu_custom_call.1} parent=5 // pred_region
        %s2611 = ssub.s32 %s15, 2
      $region126: #{tpu_custom_call.1} parent=5 // pred_fallthru
        _
    $region6: #{tpu_custom_call.1} parent=1 // loop_footer
      %s19 = sadd.s32 1, %s15
    $region7: #{tpu_custom_call.1} parent=1 // loop_footer_branch
      %14 = sbr.rel target = $region3
    $region8: #{tpu_custom_call.1} parent=1 // loop_exit
      _
    %2612 = vsyncpa [#allocation7], 1
    %s2613 = scalar_lea.sflag [#allocation7], 1
    %2614 = vsyncpa %s2613, 1

</llo_original>
